<compile_context>
chip_gen: v5e
topology: v5e:2x2
jax: 0.10.0
libtpu: 0.0.40
codegen_flags: <defaults>
</compile_context>

<pallas_src>
import functools
import math

import numpy as np
import jax
import jax.numpy as jnp
from jax import lax
from jax.experimental import pallas as pl
from jax.experimental.pallas import tpu as pltpu


# ----------------------------------------------------------------------------
# Fused PreLN transformer encoder layer (one batch tile per grid step)
# ----------------------------------------------------------------------------
def _make_encoder_kernel(batch_tile, seq_len, d_model, n_head):
    TB, S, D = batch_tile, seq_len, d_model
    hd = D // n_head
    scale = 1.0 / math.sqrt(hd)

    def layer_norm(v, g, beta):
        mu = jnp.mean(v, axis=-1, keepdims=True)
        var = jnp.mean(jnp.square(v - mu), axis=-1, keepdims=True)
        return (v - mu) * lax.rsqrt(var + 1e-5) * g + beta

    def kernel(x_ref, bias_ref, ln1g, ln1b, wqkv, bqkv, wo, bo,
               ln2g, ln2b, w1, b1, w2, b2, o_ref):
        x = x_ref[...]                                  # (TB, S, D)
        mask_bias = bias_ref[...]                       # (TB, 1, S) additive mask

        # ---- Pre-LN + fused QKV projection: one MXU call with M = TB*S ----
        xn = layer_norm(x, ln1g[...], ln1b[...])
        xn2 = xn.reshape(TB * S, D)
        qkv = jnp.dot(xn2, wqkv[...],
                      preferred_element_type=jnp.float32) + bqkv[...]   # (TB*S, 3D)

        # ---- multi-head self attention, batched over the batch tile ----
        ctx = []
        for h in range(n_head):
            qh = (qkv[:, h * hd:(h + 1) * hd] * scale).reshape(TB, S, hd)
            kh = qkv[:, D + h * hd:D + (h + 1) * hd].reshape(TB, S, hd)
            vh = qkv[:, 2 * D + h * hd:2 * D + (h + 1) * hd].reshape(TB, S, hd)
            s = jnp.einsum('bqd,bkd->bqk', qh, kh,
                           preferred_element_type=jnp.float32)          # (TB, S, S)
            s = s + mask_bias                           # key padding mask (all heads)
            s = s - jnp.max(s, axis=-1, keepdims=True)
            p = jnp.exp(s)
            p = p * pl.reciprocal(jnp.sum(p, axis=-1, keepdims=True), approx=True)
            ctx.append(jnp.einsum('bqk,bkd->bqd', p, vh,
                                  preferred_element_type=jnp.float32))
        attn = jnp.concatenate(ctx, axis=-1).reshape(TB * S, D)
        attn = jnp.dot(attn, wo[...],
                       preferred_element_type=jnp.float32) + bo[...]
        x = x + attn.reshape(TB, S, D)                  # attn_dropout = identity (eval)

        # ---- Pre-LN + feed-forward (again M = TB*S rows per matmul) ----
        xn2 = layer_norm(x, ln2g[...], ln2b[...]).reshape(TB * S, D)
        h1 = jnp.maximum(
            jnp.dot(xn2, w1[...], preferred_element_type=jnp.float32) + b1[...], 0.0)
        ffn = jnp.dot(h1, w2[...], preferred_element_type=jnp.float32) + b2[...]
        o_ref[...] = x + ffn.reshape(TB, S, D)          # dropout1/dropout2 = identity

    return kernel


def encoder_layer_call(x, mask_bias, p, n_head, batch_tile=None):
    B, S, D = x.shape
    TB = batch_tile if batch_tile is not None else B
    assert B % TB == 0, "batch tile must divide batch"

    weights = [p['ln1_g'], p['ln1_b'], p['wqkv'], p['bqkv'], p['wo'], p['bo'],
               p['ln2_g'], p['ln2_b'], p['w1'], p['b1'], p['w2'], p['b2']]

    # Weights are grid-invariant (constant block index every step).
    # TODO(synk): at production sizes, single-buffer these constant-weight specs
    # (pipeline_mode=pl.Buffered(1)) / bf16 operands to fit v7x's 64 MiB VMEM.
    def full_spec(a):
        nd = a.ndim
        return pl.BlockSpec(a.shape, lambda b, _nd=nd: (0,) * _nd)

    in_specs = ([pl.BlockSpec((TB, S, D), lambda b: (b, 0, 0)),
                 pl.BlockSpec((TB, 1, S), lambda b: (b, 0, 0))]
                + [full_spec(a) for a in weights])

    return pl.pallas_call(
        _make_encoder_kernel(TB, S, D, n_head),
        out_shape=jax.ShapeDtypeStruct((B, S, D), jnp.float32),
        grid=(B // TB,),
        in_specs=in_specs,
        out_specs=pl.BlockSpec((TB, S, D), lambda b: (b, 0, 0)),
        compiler_params=pltpu.CompilerParams(
            dimension_semantics=("parallel",)),
    )(x, mask_bias, *weights)


# ----------------------------------------------------------------------------
# Full module: stack of n_layer encoder layers
# ----------------------------------------------------------------------------
def extraction_preln_transformer(params, x, lengths, n_head, batch_tile=None):
    B, S, _ = x.shape
    # Additive key-padding bias (shared across layers and heads): (B, 1, S)
    pos = jnp.arange(S, dtype=jnp.int32)[None, None, :]
    mask_bias = jnp.where(pos >= lengths[:, None, None],
                          jnp.float32(-1e30), jnp.float32(0.0))
    for layer_p in params['layers']:
        x = encoder_layer_call(x, mask_bias, layer_p, n_head, batch_tile=batch_tile)
    return x


# ----------------------------------------------------------------------------
# Deterministic synthetic parameter init (eval-mode forward)
# ----------------------------------------------------------------------------
def init_params(key, d_model, n_layer, n_head, intermediate):
    keys = iter(jax.random.split(key, 8 * n_layer + 8))
    D = d_model

    def w(shape, fan_in):
        return (jax.random.normal(next(keys), shape, jnp.float32)
                / np.sqrt(fan_in).astype(np.float32))

    layers = []
    for _ in range(n_layer):
        wq, wk, wv = w((D, D), D), w((D, D), D), w((D, D), D)
        layers.append(dict(
            ln1_g=jnp.ones((1, D), jnp.float32),
            ln1_b=jnp.zeros((1, D), jnp.float32),
            wqkv=jnp.concatenate([wq, wk, wv], axis=1),      # fused (D, 3D)
            bqkv=jnp.zeros((1, 3 * D), jnp.float32),
            wo=w((D, D), D),
            bo=jnp.zeros((1, D), jnp.float32),
            ln2_g=jnp.ones((1, D), jnp.float32),
            ln2_b=jnp.zeros((1, D), jnp.float32),
            w1=w((D, intermediate), D),
            b1=jnp.zeros((1, intermediate), jnp.float32),
            w2=w((intermediate, D), intermediate),
            b2=jnp.zeros((1, D), jnp.float32)))
    return dict(layers=layers)


# TODO(synk): train-mode dropout is not implemented (eval-mode deterministic
# forward); zero-length sequences (all keys masked) yield uniform attention
# instead of PyTorch's NaNs.

if __name__ == "__main__":
    B, S, D = 2, 8, 32
    n_head, n_layer, intermediate = 4, 2, 64

    key = jax.random.PRNGKey(0)
    pkey, xkey = jax.random.split(key)
    params = init_params(pkey, D, n_layer, n_head, intermediate)

    x = jax.random.normal(xkey, (B, S, D), jnp.float32)
    lengths = jnp.array([8, 5], dtype=jnp.int32)   # inp_len (valid timesteps per example)

    fwd = jax.jit(functools.partial(extraction_preln_transformer, n_head=n_head))
    out = fwd(params, x, lengths)
    jax.block_until_ready(out)

    assert out.shape == (B, S, D) and out.dtype == jnp.float32
    assert bool(jnp.all(jnp.isfinite(out)))
    print("KERNEL_OK")
</pallas_src>

<mosaic_0001>
module attributes {stable_mosaic.version = 11 : i64} {
  func.func @kernel(%arg0: i32, %arg1: memref<2x8x32xf32, #tpu.memory_space<vmem>>, %arg2: memref<2x1x8xf32, #tpu.memory_space<vmem>>, %arg3: memref<1x32xf32, #tpu.memory_space<vmem>>, %arg4: memref<1x32xf32, #tpu.memory_space<vmem>>, %arg5: memref<32x96xf32, #tpu.memory_space<vmem>>, %arg6: memref<1x96xf32, #tpu.memory_space<vmem>>, %arg7: memref<32x32xf32, #tpu.memory_space<vmem>>, %arg8: memref<1x32xf32, #tpu.memory_space<vmem>>, %arg9: memref<1x32xf32, #tpu.memory_space<vmem>>, %arg10: memref<1x32xf32, #tpu.memory_space<vmem>>, %arg11: memref<32x64xf32, #tpu.memory_space<vmem>>, %arg12: memref<1x64xf32, #tpu.memory_space<vmem>>, %arg13: memref<64x32xf32, #tpu.memory_space<vmem>>, %arg14: memref<1x32xf32, #tpu.memory_space<vmem>>, %arg15: memref<2x8x32xf32, #tpu.memory_space<vmem>>) attributes {dimension_semantics = [#tpu.dimension_semantics<parallel>], iteration_bounds = array<i64: 1>, scalar_prefetch = 0 : i64, scratch_operands = 0 : i64, tpu.core_type = #tpu.core_type<tc>, window_params = [{transform_indices = @transform_0, window_bounds = array<i64: 2, 8, 32>}, {transform_indices = @transform_1, window_bounds = array<i64: 2, 1, 8>}, {pipeline_mode = #tpu.pipeline_mode<synchronous>, transform_indices = @transform_2, window_bounds = array<i64: 1, 32>}, {pipeline_mode = #tpu.pipeline_mode<synchronous>, transform_indices = @transform_3, window_bounds = array<i64: 1, 32>}, {pipeline_mode = #tpu.pipeline_mode<synchronous>, transform_indices = @transform_4, window_bounds = array<i64: 32, 96>}, {pipeline_mode = #tpu.pipeline_mode<synchronous>, transform_indices = @transform_5, window_bounds = array<i64: 1, 96>}, {pipeline_mode = #tpu.pipeline_mode<synchronous>, transform_indices = @transform_6, window_bounds = array<i64: 32, 32>}, {pipeline_mode = #tpu.pipeline_mode<synchronous>, transform_indices = @transform_7, window_bounds = array<i64: 1, 32>}, {pipeline_mode = #tpu.pipeline_mode<synchronous>, transform_indices = @transform_8, window_bounds = array<i64: 1, 32>}, {pipeline_mode = #tpu.pipeline_mode<synchronous>, transform_indices = @transform_9, window_bounds = array<i64: 1, 32>}, {pipeline_mode = #tpu.pipeline_mode<synchronous>, transform_indices = @transform_10, window_bounds = array<i64: 32, 64>}, {pipeline_mode = #tpu.pipeline_mode<synchronous>, transform_indices = @transform_11, window_bounds = array<i64: 1, 64>}, {pipeline_mode = #tpu.pipeline_mode<synchronous>, transform_indices = @transform_12, window_bounds = array<i64: 64, 32>}, {pipeline_mode = #tpu.pipeline_mode<synchronous>, transform_indices = @transform_13, window_bounds = array<i64: 1, 32>}, {transform_indices = @transform_14, window_bounds = array<i64: 2, 8, 32>}]} {
    %c0 = arith.constant 0 : index
    %c0_0 = arith.constant 0 : index
    %c0_1 = arith.constant 0 : index
    %0 = vector.load %arg1[%c0, %c0_0, %c0_1] : memref<2x8x32xf32, #tpu.memory_space<vmem>>, vector<2x8x32xf32>
    %c0_2 = arith.constant 0 : index
    %c0_3 = arith.constant 0 : index
    %c0_4 = arith.constant 0 : index
    %1 = vector.load %arg2[%c0_2, %c0_3, %c0_4] : memref<2x1x8xf32, #tpu.memory_space<vmem>>, vector<2x1x8xf32>
    %c0_5 = arith.constant 0 : index
    %c0_6 = arith.constant 0 : index
    %2 = vector.load %arg3[%c0_5, %c0_6] : memref<1x32xf32, #tpu.memory_space<vmem>>, vector<1x32xf32>
    %c0_7 = arith.constant 0 : index
    %c0_8 = arith.constant 0 : index
    %3 = vector.load %arg4[%c0_7, %c0_8] : memref<1x32xf32, #tpu.memory_space<vmem>>, vector<1x32xf32>
    %cst = arith.constant dense<0.000000e+00> : vector<2x8xf32>
    %4 = vector.multi_reduction <add>, %0, %cst [2] : vector<2x8x32xf32> to vector<2x8xf32>
    %5 = vector.shape_cast %4 : vector<2x8xf32> to vector<2x8x1xf32>
    %cst_9 = arith.constant 3.200000e+01 : f32
    %6 = vector.broadcast %cst_9 : f32 to vector<2x8x1xf32>
    %7 = arith.divf %5, %6 : vector<2x8x1xf32>
    %8 = vector.broadcast %7 : vector<2x8x1xf32> to vector<2x8x32xf32>
    %9 = arith.subf %0, %8 : vector<2x8x32xf32>
    %10 = arith.mulf %9, %9 : vector<2x8x32xf32>
    %cst_10 = arith.constant dense<0.000000e+00> : vector<2x8xf32>
    %11 = vector.multi_reduction <add>, %10, %cst_10 [2] : vector<2x8x32xf32> to vector<2x8xf32>
    %12 = vector.shape_cast %11 : vector<2x8xf32> to vector<2x8x1xf32>
    %cst_11 = arith.constant 3.200000e+01 : f32
    %13 = vector.broadcast %cst_11 : f32 to vector<2x8x1xf32>
    %14 = arith.divf %12, %13 : vector<2x8x1xf32>
    %15 = vector.broadcast %7 : vector<2x8x1xf32> to vector<2x8x32xf32>
    %16 = arith.subf %0, %15 : vector<2x8x32xf32>
    %cst_12 = arith.constant 9.99999974E-6 : f32
    %17 = vector.broadcast %cst_12 : f32 to vector<2x8x1xf32>
    %18 = arith.addf %14, %17 : vector<2x8x1xf32>
    %19 = math.rsqrt %18 : vector<2x8x1xf32>
    %20 = vector.broadcast %19 : vector<2x8x1xf32> to vector<2x8x32xf32>
    %21 = arith.mulf %16, %20 : vector<2x8x32xf32>
    %22 = vector.shape_cast %2 : vector<1x32xf32> to vector<1x1x32xf32>
    %23 = vector.broadcast %22 : vector<1x1x32xf32> to vector<2x8x32xf32>
    %24 = arith.mulf %21, %23 : vector<2x8x32xf32>
    %25 = vector.shape_cast %3 : vector<1x32xf32> to vector<1x1x32xf32>
    %26 = vector.broadcast %25 : vector<1x1x32xf32> to vector<2x8x32xf32>
    %27 = arith.addf %24, %26 : vector<2x8x32xf32>
    %28 = vector.shape_cast %27 : vector<2x8x32xf32> to vector<16x32xf32>
    %c0_13 = arith.constant 0 : index
    %c0_14 = arith.constant 0 : index
    %29 = vector.load %arg5[%c0_13, %c0_14] : memref<32x96xf32, #tpu.memory_space<vmem>>, vector<32x96xf32>
    %cst_15 = arith.constant dense<0.000000e+00> : vector<16x96xf32>
    %30 = tpu.matmul %28, %29, %cst_15 {dimension_numbers = #tpu.dot_dimension_numbers<[1], [0], [0], [1], [0, 0, 1, 1], [], []>} : vector<16x32xf32>, vector<32x96xf32>, vector<16x96xf32> -> vector<16x96xf32>
    %c0_16 = arith.constant 0 : index
    %c0_17 = arith.constant 0 : index
    %31 = vector.load %arg6[%c0_16, %c0_17] : memref<1x96xf32, #tpu.memory_space<vmem>>, vector<1x96xf32>
    %32 = vector.broadcast %31 : vector<1x96xf32> to vector<16x96xf32>
    %33 = arith.addf %30, %32 : vector<16x96xf32>
    %34 = vector.extract_strided_slice %33 {offsets = [0, 0], sizes = [16, 8], strides = [1, 1]} : vector<16x96xf32> to vector<16x8xf32>
    %cst_18 = arith.constant 0.353553385 : f32
    %35 = vector.broadcast %cst_18 : f32 to vector<16x8xf32>
    %36 = arith.mulf %34, %35 : vector<16x8xf32>
    %37 = vector.shape_cast %36 : vector<16x8xf32> to vector<2x8x8xf32>
    %38 = vector.extract_strided_slice %33 {offsets = [0, 32], sizes = [16, 8], strides = [1, 1]} : vector<16x96xf32> to vector<16x8xf32>
    %39 = vector.shape_cast %38 : vector<16x8xf32> to vector<2x8x8xf32>
    %40 = vector.extract_strided_slice %33 {offsets = [0, 64], sizes = [16, 8], strides = [1, 1]} : vector<16x96xf32> to vector<16x8xf32>
    %41 = vector.shape_cast %40 : vector<16x8xf32> to vector<2x8x8xf32>
    "tpu.trace_start"() <{level = 10 : i32, message = "bqd,bkd->bqk"}> : () -> ()
    %cst_19 = arith.constant dense<0.000000e+00> : vector<2x8x8xf32>
    %42 = tpu.matmul %37, %39, %cst_19 {dimension_numbers = #tpu.dot_dimension_numbers<[2], [2], [1], [1], [0, 0, 0, 1, 1, 1], [0], [0]>} : vector<2x8x8xf32>, vector<2x8x8xf32>, vector<2x8x8xf32> -> vector<2x8x8xf32>
    "tpu.trace_stop"() : () -> ()
    %43 = vector.broadcast %1 : vector<2x1x8xf32> to vector<2x8x8xf32>
    %44 = arith.addf %42, %43 : vector<2x8x8xf32>
    %cst_20 = arith.constant dense<0xFF800000> : vector<2x8xf32>
    %45 = vector.multi_reduction <maximumf>, %44, %cst_20 [2] : vector<2x8x8xf32> to vector<2x8xf32>
    %46 = vector.shape_cast %45 : vector<2x8xf32> to vector<2x8x1xf32>
    %47 = vector.broadcast %46 : vector<2x8x1xf32> to vector<2x8x8xf32>
    %48 = arith.subf %44, %47 : vector<2x8x8xf32>
    %49 = math.exp %48 : vector<2x8x8xf32>
    %cst_21 = arith.constant dense<0.000000e+00> : vector<2x8xf32>
    %50 = vector.multi_reduction <add>, %49, %cst_21 [2] : vector<2x8x8xf32> to vector<2x8xf32>
    %51 = vector.shape_cast %50 : vector<2x8xf32> to vector<2x8x1xf32>
    %52 = tpu.reciprocal %51 {approx = true} : vector<2x8x1xf32> -> vector<2x8x1xf32>
    %53 = vector.broadcast %52 : vector<2x8x1xf32> to vector<2x8x8xf32>
    %54 = arith.mulf %49, %53 : vector<2x8x8xf32>
    "tpu.trace_start"() <{level = 10 : i32, message = "bqk,bkd->bqd"}> : () -> ()
    %cst_22 = arith.constant dense<0.000000e+00> : vector<2x8x8xf32>
    %55 = tpu.matmul %54, %41, %cst_22 {dimension_numbers = #tpu.dot_dimension_numbers<[2], [1], [1], [2], [0, 0, 0, 1, 1, 2], [0], [0]>} : vector<2x8x8xf32>, vector<2x8x8xf32>, vector<2x8x8xf32> -> vector<2x8x8xf32>
    "tpu.trace_stop"() : () -> ()
    %56 = vector.extract_strided_slice %33 {offsets = [0, 8], sizes = [16, 8], strides = [1, 1]} : vector<16x96xf32> to vector<16x8xf32>
    %cst_23 = arith.constant 0.353553385 : f32
    %57 = vector.broadcast %cst_23 : f32 to vector<16x8xf32>
    %58 = arith.mulf %56, %57 : vector<16x8xf32>
    %59 = vector.shape_cast %58 : vector<16x8xf32> to vector<2x8x8xf32>
    %60 = vector.extract_strided_slice %33 {offsets = [0, 40], sizes = [16, 8], strides = [1, 1]} : vector<16x96xf32> to vector<16x8xf32>
    %61 = vector.shape_cast %60 : vector<16x8xf32> to vector<2x8x8xf32>
    %62 = vector.extract_strided_slice %33 {offsets = [0, 72], sizes = [16, 8], strides = [1, 1]} : vector<16x96xf32> to vector<16x8xf32>
    %63 = vector.shape_cast %62 : vector<16x8xf32> to vector<2x8x8xf32>
    "tpu.trace_start"() <{level = 10 : i32, message = "bqd,bkd->bqk"}> : () -> ()
    %cst_24 = arith.constant dense<0.000000e+00> : vector<2x8x8xf32>
    %64 = tpu.matmul %59, %61, %cst_24 {dimension_numbers = #tpu.dot_dimension_numbers<[2], [2], [1], [1], [0, 0, 0, 1, 1, 1], [0], [0]>} : vector<2x8x8xf32>, vector<2x8x8xf32>, vector<2x8x8xf32> -> vector<2x8x8xf32>
    "tpu.trace_stop"() : () -> ()
    %65 = vector.broadcast %1 : vector<2x1x8xf32> to vector<2x8x8xf32>
    %66 = arith.addf %64, %65 : vector<2x8x8xf32>
    %cst_25 = arith.constant dense<0xFF800000> : vector<2x8xf32>
    %67 = vector.multi_reduction <maximumf>, %66, %cst_25 [2] : vector<2x8x8xf32> to vector<2x8xf32>
    %68 = vector.shape_cast %67 : vector<2x8xf32> to vector<2x8x1xf32>
    %69 = vector.broadcast %68 : vector<2x8x1xf32> to vector<2x8x8xf32>
    %70 = arith.subf %66, %69 : vector<2x8x8xf32>
    %71 = math.exp %70 : vector<2x8x8xf32>
    %cst_26 = arith.constant dense<0.000000e+00> : vector<2x8xf32>
    %72 = vector.multi_reduction <add>, %71, %cst_26 [2] : vector<2x8x8xf32> to vector<2x8xf32>
    %73 = vector.shape_cast %72 : vector<2x8xf32> to vector<2x8x1xf32>
    %74 = tpu.reciprocal %73 {approx = true} : vector<2x8x1xf32> -> vector<2x8x1xf32>
    %75 = vector.broadcast %74 : vector<2x8x1xf32> to vector<2x8x8xf32>
    %76 = arith.mulf %71, %75 : vector<2x8x8xf32>
    "tpu.trace_start"() <{level = 10 : i32, message = "bqk,bkd->bqd"}> : () -> ()
    %cst_27 = arith.constant dense<0.000000e+00> : vector<2x8x8xf32>
    %77 = tpu.matmul %76, %63, %cst_27 {dimension_numbers = #tpu.dot_dimension_numbers<[2], [1], [1], [2], [0, 0, 0, 1, 1, 2], [0], [0]>} : vector<2x8x8xf32>, vector<2x8x8xf32>, vector<2x8x8xf32> -> vector<2x8x8xf32>
    "tpu.trace_stop"() : () -> ()
    %78 = vector.extract_strided_slice %33 {offsets = [0, 16], sizes = [16, 8], strides = [1, 1]} : vector<16x96xf32> to vector<16x8xf32>
    %cst_28 = arith.constant 0.353553385 : f32
    %79 = vector.broadcast %cst_28 : f32 to vector<16x8xf32>
    %80 = arith.mulf %78, %79 : vector<16x8xf32>
    %81 = vector.shape_cast %80 : vector<16x8xf32> to vector<2x8x8xf32>
    %82 = vector.extract_strided_slice %33 {offsets = [0, 48], sizes = [16, 8], strides = [1, 1]} : vector<16x96xf32> to vector<16x8xf32>
    %83 = vector.shape_cast %82 : vector<16x8xf32> to vector<2x8x8xf32>
    %84 = vector.extract_strided_slice %33 {offsets = [0, 80], sizes = [16, 8], strides = [1, 1]} : vector<16x96xf32> to vector<16x8xf32>
    %85 = vector.shape_cast %84 : vector<16x8xf32> to vector<2x8x8xf32>
    "tpu.trace_start"() <{level = 10 : i32, message = "bqd,bkd->bqk"}> : () -> ()
    %cst_29 = arith.constant dense<0.000000e+00> : vector<2x8x8xf32>
    %86 = tpu.matmul %81, %83, %cst_29 {dimension_numbers = #tpu.dot_dimension_numbers<[2], [2], [1], [1], [0, 0, 0, 1, 1, 1], [0], [0]>} : vector<2x8x8xf32>, vector<2x8x8xf32>, vector<2x8x8xf32> -> vector<2x8x8xf32>
    "tpu.trace_stop"() : () -> ()
    %87 = vector.broadcast %1 : vector<2x1x8xf32> to vector<2x8x8xf32>
    %88 = arith.addf %86, %87 : vector<2x8x8xf32>
    %cst_30 = arith.constant dense<0xFF800000> : vector<2x8xf32>
    %89 = vector.multi_reduction <maximumf>, %88, %cst_30 [2] : vector<2x8x8xf32> to vector<2x8xf32>
    %90 = vector.shape_cast %89 : vector<2x8xf32> to vector<2x8x1xf32>
    %91 = vector.broadcast %90 : vector<2x8x1xf32> to vector<2x8x8xf32>
    %92 = arith.subf %88, %91 : vector<2x8x8xf32>
    %93 = math.exp %92 : vector<2x8x8xf32>
    %cst_31 = arith.constant dense<0.000000e+00> : vector<2x8xf32>
    %94 = vector.multi_reduction <add>, %93, %cst_31 [2] : vector<2x8x8xf32> to vector<2x8xf32>
    %95 = vector.shape_cast %94 : vector<2x8xf32> to vector<2x8x1xf32>
    %96 = tpu.reciprocal %95 {approx = true} : vector<2x8x1xf32> -> vector<2x8x1xf32>
    %97 = vector.broadcast %96 : vector<2x8x1xf32> to vector<2x8x8xf32>
    %98 = arith.mulf %93, %97 : vector<2x8x8xf32>
    "tpu.trace_start"() <{level = 10 : i32, message = "bqk,bkd->bqd"}> : () -> ()
    %cst_32 = arith.constant dense<0.000000e+00> : vector<2x8x8xf32>
    %99 = tpu.matmul %98, %85, %cst_32 {dimension_numbers = #tpu.dot_dimension_numbers<[2], [1], [1], [2], [0, 0, 0, 1, 1, 2], [0], [0]>} : vector<2x8x8xf32>, vector<2x8x8xf32>, vector<2x8x8xf32> -> vector<2x8x8xf32>
    "tpu.trace_stop"() : () -> ()
    %100 = vector.extract_strided_slice %33 {offsets = [0, 24], sizes = [16, 8], strides = [1, 1]} : vector<16x96xf32> to vector<16x8xf32>
    %cst_33 = arith.constant 0.353553385 : f32
    %101 = vector.broadcast %cst_33 : f32 to vector<16x8xf32>
    %102 = arith.mulf %100, %101 : vector<16x8xf32>
    %103 = vector.shape_cast %102 : vector<16x8xf32> to vector<2x8x8xf32>
    %104 = vector.extract_strided_slice %33 {offsets = [0, 56], sizes = [16, 8], strides = [1, 1]} : vector<16x96xf32> to vector<16x8xf32>
    %105 = vector.shape_cast %104 : vector<16x8xf32> to vector<2x8x8xf32>
    %106 = vector.extract_strided_slice %33 {offsets = [0, 88], sizes = [16, 8], strides = [1, 1]} : vector<16x96xf32> to vector<16x8xf32>
    %107 = vector.shape_cast %106 : vector<16x8xf32> to vector<2x8x8xf32>
    "tpu.trace_start"() <{level = 10 : i32, message = "bqd,bkd->bqk"}> : () -> ()
    %cst_34 = arith.constant dense<0.000000e+00> : vector<2x8x8xf32>
    %108 = tpu.matmul %103, %105, %cst_34 {dimension_numbers = #tpu.dot_dimension_numbers<[2], [2], [1], [1], [0, 0, 0, 1, 1, 1], [0], [0]>} : vector<2x8x8xf32>, vector<2x8x8xf32>, vector<2x8x8xf32> -> vector<2x8x8xf32>
    "tpu.trace_stop"() : () -> ()
    %109 = vector.broadcast %1 : vector<2x1x8xf32> to vector<2x8x8xf32>
    %110 = arith.addf %108, %109 : vector<2x8x8xf32>
    %cst_35 = arith.constant dense<0xFF800000> : vector<2x8xf32>
    %111 = vector.multi_reduction <maximumf>, %110, %cst_35 [2] : vector<2x8x8xf32> to vector<2x8xf32>
    %112 = vector.shape_cast %111 : vector<2x8xf32> to vector<2x8x1xf32>
    %113 = vector.broadcast %112 : vector<2x8x1xf32> to vector<2x8x8xf32>
    %114 = arith.subf %110, %113 : vector<2x8x8xf32>
    %115 = math.exp %114 : vector<2x8x8xf32>
    %cst_36 = arith.constant dense<0.000000e+00> : vector<2x8xf32>
    %116 = vector.multi_reduction <add>, %115, %cst_36 [2] : vector<2x8x8xf32> to vector<2x8xf32>
    %117 = vector.shape_cast %116 : vector<2x8xf32> to vector<2x8x1xf32>
    %118 = tpu.reciprocal %117 {approx = true} : vector<2x8x1xf32> -> vector<2x8x1xf32>
    %119 = vector.broadcast %118 : vector<2x8x1xf32> to vector<2x8x8xf32>
    %120 = arith.mulf %115, %119 : vector<2x8x8xf32>
    "tpu.trace_start"() <{level = 10 : i32, message = "bqk,bkd->bqd"}> : () -> ()
    %cst_37 = arith.constant dense<0.000000e+00> : vector<2x8x8xf32>
    %121 = tpu.matmul %120, %107, %cst_37 {dimension_numbers = #tpu.dot_dimension_numbers<[2], [1], [1], [2], [0, 0, 0, 1, 1, 2], [0], [0]>} : vector<2x8x8xf32>, vector<2x8x8xf32>, vector<2x8x8xf32> -> vector<2x8x8xf32>
    "tpu.trace_stop"() : () -> ()
    %122 = tpu.concatenate %55, %77, %99, %121 in 2 : vector<2x8x8xf32>, vector<2x8x8xf32>, vector<2x8x8xf32>, vector<2x8x8xf32> -> vector<2x8x32xf32>
    %123 = vector.shape_cast %122 : vector<2x8x32xf32> to vector<16x32xf32>
    %c0_38 = arith.constant 0 : index
    %c0_39 = arith.constant 0 : index
    %124 = vector.load %arg7[%c0_38, %c0_39] : memref<32x32xf32, #tpu.memory_space<vmem>>, vector<32x32xf32>
    %cst_40 = arith.constant dense<0.000000e+00> : vector<16x32xf32>
    %125 = tpu.matmul %123, %124, %cst_40 {dimension_numbers = #tpu.dot_dimension_numbers<[1], [0], [0], [1], [0, 0, 1, 1], [], []>} : vector<16x32xf32>, vector<32x32xf32>, vector<16x32xf32> -> vector<16x32xf32>
    %c0_41 = arith.constant 0 : index
    %c0_42 = arith.constant 0 : index
    %126 = vector.load %arg8[%c0_41, %c0_42] : memref<1x32xf32, #tpu.memory_space<vmem>>, vector<1x32xf32>
    %127 = vector.broadcast %126 : vector<1x32xf32> to vector<16x32xf32>
    %128 = arith.addf %125, %127 : vector<16x32xf32>
    %129 = vector.shape_cast %128 : vector<16x32xf32> to vector<2x8x32xf32>
    %130 = arith.addf %0, %129 : vector<2x8x32xf32>
    %c0_43 = arith.constant 0 : index
    %c0_44 = arith.constant 0 : index
    %131 = vector.load %arg9[%c0_43, %c0_44] : memref<1x32xf32, #tpu.memory_space<vmem>>, vector<1x32xf32>
    %c0_45 = arith.constant 0 : index
    %c0_46 = arith.constant 0 : index
    %132 = vector.load %arg10[%c0_45, %c0_46] : memref<1x32xf32, #tpu.memory_space<vmem>>, vector<1x32xf32>
    %cst_47 = arith.constant dense<0.000000e+00> : vector<2x8xf32>
    %133 = vector.multi_reduction <add>, %130, %cst_47 [2] : vector<2x8x32xf32> to vector<2x8xf32>
    %134 = vector.shape_cast %133 : vector<2x8xf32> to vector<2x8x1xf32>
    %cst_48 = arith.constant 3.200000e+01 : f32
    %135 = vector.broadcast %cst_48 : f32 to vector<2x8x1xf32>
    %136 = arith.divf %134, %135 : vector<2x8x1xf32>
    %137 = vector.broadcast %136 : vector<2x8x1xf32> to vector<2x8x32xf32>
    %138 = arith.subf %130, %137 : vector<2x8x32xf32>
    %139 = arith.mulf %138, %138 : vector<2x8x32xf32>
    %cst_49 = arith.constant dense<0.000000e+00> : vector<2x8xf32>
    %140 = vector.multi_reduction <add>, %139, %cst_49 [2] : vector<2x8x32xf32> to vector<2x8xf32>
    %141 = vector.shape_cast %140 : vector<2x8xf32> to vector<2x8x1xf32>
    %cst_50 = arith.constant 3.200000e+01 : f32
    %142 = vector.broadcast %cst_50 : f32 to vector<2x8x1xf32>
    %143 = arith.divf %141, %142 : vector<2x8x1xf32>
    %144 = vector.broadcast %136 : vector<2x8x1xf32> to vector<2x8x32xf32>
    %145 = arith.subf %130, %144 : vector<2x8x32xf32>
    %cst_51 = arith.constant 9.99999974E-6 : f32
    %146 = vector.broadcast %cst_51 : f32 to vector<2x8x1xf32>
    %147 = arith.addf %143, %146 : vector<2x8x1xf32>
    %148 = math.rsqrt %147 : vector<2x8x1xf32>
    %149 = vector.broadcast %148 : vector<2x8x1xf32> to vector<2x8x32xf32>
    %150 = arith.mulf %145, %149 : vector<2x8x32xf32>
    %151 = vector.shape_cast %131 : vector<1x32xf32> to vector<1x1x32xf32>
    %152 = vector.broadcast %151 : vector<1x1x32xf32> to vector<2x8x32xf32>
    %153 = arith.mulf %150, %152 : vector<2x8x32xf32>
    %154 = vector.shape_cast %132 : vector<1x32xf32> to vector<1x1x32xf32>
    %155 = vector.broadcast %154 : vector<1x1x32xf32> to vector<2x8x32xf32>
    %156 = arith.addf %153, %155 : vector<2x8x32xf32>
    %157 = vector.shape_cast %156 : vector<2x8x32xf32> to vector<16x32xf32>
    %c0_52 = arith.constant 0 : index
    %c0_53 = arith.constant 0 : index
    %158 = vector.load %arg11[%c0_52, %c0_53] : memref<32x64xf32, #tpu.memory_space<vmem>>, vector<32x64xf32>
    %cst_54 = arith.constant dense<0.000000e+00> : vector<16x64xf32>
    %159 = tpu.matmul %157, %158, %cst_54 {dimension_numbers = #tpu.dot_dimension_numbers<[1], [0], [0], [1], [0, 0, 1, 1], [], []>} : vector<16x32xf32>, vector<32x64xf32>, vector<16x64xf32> -> vector<16x64xf32>
    %c0_55 = arith.constant 0 : index
    %c0_56 = arith.constant 0 : index
    %160 = vector.load %arg12[%c0_55, %c0_56] : memref<1x64xf32, #tpu.memory_space<vmem>>, vector<1x64xf32>
    %161 = vector.broadcast %160 : vector<1x64xf32> to vector<16x64xf32>
    %162 = arith.addf %159, %161 : vector<16x64xf32>
    %cst_57 = arith.constant 0.000000e+00 : f32
    %163 = vector.broadcast %cst_57 : f32 to vector<16x64xf32>
    %164 = arith.maximumf %162, %163 : vector<16x64xf32>
    %c0_58 = arith.constant 0 : index
    %c0_59 = arith.constant 0 : index
    %165 = vector.load %arg13[%c0_58, %c0_59] : memref<64x32xf32, #tpu.memory_space<vmem>>, vector<64x32xf32>
    %cst_60 = arith.constant dense<0.000000e+00> : vector<16x32xf32>
    %166 = tpu.matmul %164, %165, %cst_60 {dimension_numbers = #tpu.dot_dimension_numbers<[1], [0], [0], [1], [0, 0, 1, 1], [], []>} : vector<16x64xf32>, vector<64x32xf32>, vector<16x32xf32> -> vector<16x32xf32>
    %c0_61 = arith.constant 0 : index
    %c0_62 = arith.constant 0 : index
    %167 = vector.load %arg14[%c0_61, %c0_62] : memref<1x32xf32, #tpu.memory_space<vmem>>, vector<1x32xf32>
    %168 = vector.broadcast %167 : vector<1x32xf32> to vector<16x32xf32>
    %169 = arith.addf %166, %168 : vector<16x32xf32>
    %170 = vector.shape_cast %169 : vector<16x32xf32> to vector<2x8x32xf32>
    %171 = arith.addf %130, %170 : vector<2x8x32xf32>
    %c0_63 = arith.constant 0 : index
    %c0_64 = arith.constant 0 : index
    %c0_65 = arith.constant 0 : index
    %172 = vector.load %arg15[%c0_63, %c0_64, %c0_65] : memref<2x8x32xf32, #tpu.memory_space<vmem>>, vector<2x8x32xf32>
    tpu.vector_store %arg15[%c0_63, %c0_64, %c0_65], %171 {strides = array<i32>} : memref<2x8x32xf32, #tpu.memory_space<vmem>>, vector<2x8x32xf32>,
    return
  }
  func.func @transform_0(%arg0: i32) -> (i32, i32, i32) {
    %c0_i32 = arith.constant 0 : i32
    %c0_i32_0 = arith.constant 0 : i32
    %c0_i32_1 = arith.constant 0 : i32
    return %arg0, %c0_i32, %c0_i32_0 : i32, i32, i32
  }
  func.func @transform_1(%arg0: i32) -> (i32, i32, i32) {
    %c0_i32 = arith.constant 0 : i32
    %c0_i32_0 = arith.constant 0 : i32
    %c0_i32_1 = arith.constant 0 : i32
    return %arg0, %c0_i32, %c0_i32_0 : i32, i32, i32
  }
  func.func @transform_2(%arg0: i32) -> (i32, i32) {
    %c0_i32 = arith.constant 0 : i32
    %c0_i32_0 = arith.constant 0 : i32
    %c0_i32_1 = arith.constant 0 : i32
    return %c0_i32, %c0_i32_0 : i32, i32
  }
  func.func @transform_3(%arg0: i32) -> (i32, i32) {
    %c0_i32 = arith.constant 0 : i32
    %c0_i32_0 = arith.constant 0 : i32
    %c0_i32_1 = arith.constant 0 : i32
    return %c0_i32, %c0_i32_0 : i32, i32
  }
  func.func @transform_4(%arg0: i32) -> (i32, i32) {
    %c0_i32 = arith.constant 0 : i32
    %c0_i32_0 = arith.constant 0 : i32
    %c0_i32_1 = arith.constant 0 : i32
    return %c0_i32, %c0_i32_0 : i32, i32
  }
  func.func @transform_5(%arg0: i32) -> (i32, i32) {
    %c0_i32 = arith.constant 0 : i32
    %c0_i32_0 = arith.constant 0 : i32
    %c0_i32_1 = arith.constant 0 : i32
    return %c0_i32, %c0_i32_0 : i32, i32
  }
  func.func @transform_6(%arg0: i32) -> (i32, i32) {
    %c0_i32 = arith.constant 0 : i32
    %c0_i32_0 = arith.constant 0 : i32
    %c0_i32_1 = arith.constant 0 : i32
    return %c0_i32, %c0_i32_0 : i32, i32
  }
  func.func @transform_7(%arg0: i32) -> (i32, i32) {
    %c0_i32 = arith.constant 0 : i32
    %c0_i32_0 = arith.constant 0 : i32
    %c0_i32_1 = arith.constant 0 : i32
    return %c0_i32, %c0_i32_0 : i32, i32
  }
  func.func @transform_8(%arg0: i32) -> (i32, i32) {
    %c0_i32 = arith.constant 0 : i32
    %c0_i32_0 = arith.constant 0 : i32
    %c0_i32_1 = arith.constant 0 : i32
    return %c0_i32, %c0_i32_0 : i32, i32
  }
  func.func @transform_9(%arg0: i32) -> (i32, i32) {
    %c0_i32 = arith.constant 0 : i32
    %c0_i32_0 = arith.constant 0 : i32
    %c0_i32_1 = arith.constant 0 : i32
    return %c0_i32, %c0_i32_0 : i32, i32
  }
  func.func @transform_10(%arg0: i32) -> (i32, i32) {
    %c0_i32 = arith.constant 0 : i32
    %c0_i32_0 = arith.constant 0 : i32
    %c0_i32_1 = arith.constant 0 : i32
    return %c0_i32, %c0_i32_0 : i32, i32
  }
  func.func @transform_11(%arg0: i32) -> (i32, i32) {
    %c0_i32 = arith.constant 0 : i32
    %c0_i32_0 = arith.constant 0 : i32
    %c0_i32_1 = arith.constant 0 : i32
    return %c0_i32, %c0_i32_0 : i32, i32
  }
  func.func @transform_12(%arg0: i32) -> (i32, i32) {
    %c0_i32 = arith.constant 0 : i32
    %c0_i32_0 = arith.constant 0 : i32
    %c0_i32_1 = arith.constant 0 : i32
    return %c0_i32, %c0_i32_0 : i32, i32
  }
  func.func @transform_13(%arg0: i32) -> (i32, i32) {
    %c0_i32 = arith.constant 0 : i32
    %c0_i32_0 = arith.constant 0 : i32
    %c0_i32_1 = arith.constant 0 : i32
    return %c0_i32, %c0_i32_0 : i32, i32
  }
  func.func @transform_14(%arg0: i32) -> (i32, i32, i32) {
    %c0_i32 = arith.constant 0 : i32
    %c0_i32_0 = arith.constant 0 : i32
    %c0_i32_1 = arith.constant 0 : i32
    return %arg0, %c0_i32, %c0_i32_0 : i32, i32, i32
  }
}

module attributes {stable_mosaic.version = 11 : i64} {
  func.func @kernel(%arg0: i32, %arg1: memref<2x8x32xf32, #tpu.memory_space<vmem>>, %arg2: memref<2x1x8xf32, #tpu.memory_space<vmem>>, %arg3: memref<1x32xf32, #tpu.memory_space<vmem>>, %arg4: memref<1x32xf32, #tpu.memory_space<vmem>>, %arg5: memref<32x96xf32, #tpu.memory_space<vmem>>, %arg6: memref<1x96xf32, #tpu.memory_space<vmem>>, %arg7: memref<32x32xf32, #tpu.memory_space<vmem>>, %arg8: memref<1x32xf32, #tpu.memory_space<vmem>>, %arg9: memref<1x32xf32, #tpu.memory_space<vmem>>, %arg10: memref<1x32xf32, #tpu.memory_space<vmem>>, %arg11: memref<32x64xf32, #tpu.memory_space<vmem>>, %arg12: memref<1x64xf32, #tpu.memory_space<vmem>>, %arg13: memref<64x32xf32, #tpu.memory_space<vmem>>, %arg14: memref<1x32xf32, #tpu.memory_space<vmem>>, %arg15: memref<2x8x32xf32, #tpu.memory_space<vmem>>) attributes {dimension_semantics = [#tpu.dimension_semantics<parallel>], iteration_bounds = array<i64: 1>, scalar_prefetch = 0 : i64, scratch_operands = 0 : i64, tpu.core_type = #tpu.core_type<tc>, window_params = [{transform_indices = @transform_0, window_bounds = array<i64: 2, 8, 32>}, {transform_indices = @transform_1, window_bounds = array<i64: 2, 1, 8>}, {pipeline_mode = #tpu.pipeline_mode<synchronous>, transform_indices = @transform_2, window_bounds = array<i64: 1, 32>}, {pipeline_mode = #tpu.pipeline_mode<synchronous>, transform_indices = @transform_3, window_bounds = array<i64: 1, 32>}, {pipeline_mode = #tpu.pipeline_mode<synchronous>, transform_indices = @transform_4, window_bounds = array<i64: 32, 96>}, {pipeline_mode = #tpu.pipeline_mode<synchronous>, transform_indices = @transform_5, window_bounds = array<i64: 1, 96>}, {pipeline_mode = #tpu.pipeline_mode<synchronous>, transform_indices = @transform_6, window_bounds = array<i64: 32, 32>}, {pipeline_mode = #tpu.pipeline_mode<synchronous>, transform_indices = @transform_7, window_bounds = array<i64: 1, 32>}, {pipeline_mode = #tpu.pipeline_mode<synchronous>, transform_indices = @transform_8, window_bounds = array<i64: 1, 32>}, {pipeline_mode = #tpu.pipeline_mode<synchronous>, transform_indices = @transform_9, window_bounds = array<i64: 1, 32>}, {pipeline_mode = #tpu.pipeline_mode<synchronous>, transform_indices = @transform_10, window_bounds = array<i64: 32, 64>}, {pipeline_mode = #tpu.pipeline_mode<synchronous>, transform_indices = @transform_11, window_bounds = array<i64: 1, 64>}, {pipeline_mode = #tpu.pipeline_mode<synchronous>, transform_indices = @transform_12, window_bounds = array<i64: 64, 32>}, {pipeline_mode = #tpu.pipeline_mode<synchronous>, transform_indices = @transform_13, window_bounds = array<i64: 1, 32>}, {transform_indices = @transform_14, window_bounds = array<i64: 2, 8, 32>}]} {
    %c0 = arith.constant 0 : index
    %c0_0 = arith.constant 0 : index
    %c0_1 = arith.constant 0 : index
    %0 = vector.load %arg1[%c0, %c0_0, %c0_1] : memref<2x8x32xf32, #tpu.memory_space<vmem>>, vector<2x8x32xf32>
    %c0_2 = arith.constant 0 : index
    %c0_3 = arith.constant 0 : index
    %c0_4 = arith.constant 0 : index
    %1 = vector.load %arg2[%c0_2, %c0_3, %c0_4] : memref<2x1x8xf32, #tpu.memory_space<vmem>>, vector<2x1x8xf32>
    %c0_5 = arith.constant 0 : index
    %c0_6 = arith.constant 0 : index
    %2 = vector.load %arg3[%c0_5, %c0_6] : memref<1x32xf32, #tpu.memory_space<vmem>>, vector<1x32xf32>
    %c0_7 = arith.constant 0 : index
    %c0_8 = arith.constant 0 : index
    %3 = vector.load %arg4[%c0_7, %c0_8] : memref<1x32xf32, #tpu.memory_space<vmem>>, vector<1x32xf32>
    %cst = arith.constant dense<0.000000e+00> : vector<2x8xf32>
    %4 = vector.multi_reduction <add>, %0, %cst [2] : vector<2x8x32xf32> to vector<2x8xf32>
    %5 = vector.shape_cast %4 : vector<2x8xf32> to vector<2x8x1xf32>
    %cst_9 = arith.constant 3.200000e+01 : f32
    %6 = vector.broadcast %cst_9 : f32 to vector<2x8x1xf32>
    %7 = arith.divf %5, %6 : vector<2x8x1xf32>
    %8 = vector.broadcast %7 : vector<2x8x1xf32> to vector<2x8x32xf32>
    %9 = arith.subf %0, %8 : vector<2x8x32xf32>
    %10 = arith.mulf %9, %9 : vector<2x8x32xf32>
    %cst_10 = arith.constant dense<0.000000e+00> : vector<2x8xf32>
    %11 = vector.multi_reduction <add>, %10, %cst_10 [2] : vector<2x8x32xf32> to vector<2x8xf32>
    %12 = vector.shape_cast %11 : vector<2x8xf32> to vector<2x8x1xf32>
    %cst_11 = arith.constant 3.200000e+01 : f32
    %13 = vector.broadcast %cst_11 : f32 to vector<2x8x1xf32>
    %14 = arith.divf %12, %13 : vector<2x8x1xf32>
    %15 = vector.broadcast %7 : vector<2x8x1xf32> to vector<2x8x32xf32>
    %16 = arith.subf %0, %15 : vector<2x8x32xf32>
    %cst_12 = arith.constant 9.99999974E-6 : f32
    %17 = vector.broadcast %cst_12 : f32 to vector<2x8x1xf32>
    %18 = arith.addf %14, %17 : vector<2x8x1xf32>
    %19 = math.rsqrt %18 : vector<2x8x1xf32>
    %20 = vector.broadcast %19 : vector<2x8x1xf32> to vector<2x8x32xf32>
    %21 = arith.mulf %16, %20 : vector<2x8x32xf32>
    %22 = vector.shape_cast %2 : vector<1x32xf32> to vector<1x1x32xf32>
    %23 = vector.broadcast %22 : vector<1x1x32xf32> to vector<2x8x32xf32>
    %24 = arith.mulf %21, %23 : vector<2x8x32xf32>
    %25 = vector.shape_cast %3 : vector<1x32xf32> to vector<1x1x32xf32>
    %26 = vector.broadcast %25 : vector<1x1x32xf32> to vector<2x8x32xf32>
    %27 = arith.addf %24, %26 : vector<2x8x32xf32>
    %28 = vector.shape_cast %27 : vector<2x8x32xf32> to vector<16x32xf32>
    %c0_13 = arith.constant 0 : index
    %c0_14 = arith.constant 0 : index
    %29 = vector.load %arg5[%c0_13, %c0_14] : memref<32x96xf32, #tpu.memory_space<vmem>>, vector<32x96xf32>
    %cst_15 = arith.constant dense<0.000000e+00> : vector<16x96xf32>
    %30 = tpu.matmul %28, %29, %cst_15 {dimension_numbers = #tpu.dot_dimension_numbers<[1], [0], [0], [1], [0, 0, 1, 1], [], []>} : vector<16x32xf32>, vector<32x96xf32>, vector<16x96xf32> -> vector<16x96xf32>
    %c0_16 = arith.constant 0 : index
    %c0_17 = arith.constant 0 : index
    %31 = vector.load %arg6[%c0_16, %c0_17] : memref<1x96xf32, #tpu.memory_space<vmem>>, vector<1x96xf32>
    %32 = vector.broadcast %31 : vector<1x96xf32> to vector<16x96xf32>
    %33 = arith.addf %30, %32 : vector<16x96xf32>
    %34 = vector.extract_strided_slice %33 {offsets = [0, 0], sizes = [16, 8], strides = [1, 1]} : vector<16x96xf32> to vector<16x8xf32>
    %cst_18 = arith.constant 0.353553385 : f32
    %35 = vector.broadcast %cst_18 : f32 to vector<16x8xf32>
    %36 = arith.mulf %34, %35 : vector<16x8xf32>
    %37 = vector.shape_cast %36 : vector<16x8xf32> to vector<2x8x8xf32>
    %38 = vector.extract_strided_slice %33 {offsets = [0, 32], sizes = [16, 8], strides = [1, 1]} : vector<16x96xf32> to vector<16x8xf32>
    %39 = vector.shape_cast %38 : vector<16x8xf32> to vector<2x8x8xf32>
    %40 = vector.extract_strided_slice %33 {offsets = [0, 64], sizes = [16, 8], strides = [1, 1]} : vector<16x96xf32> to vector<16x8xf32>
    %41 = vector.shape_cast %40 : vector<16x8xf32> to vector<2x8x8xf32>
    "tpu.trace_start"() <{level = 10 : i32, message = "bqd,bkd->bqk"}> : () -> ()
    %cst_19 = arith.constant dense<0.000000e+00> : vector<2x8x8xf32>
    %42 = tpu.matmul %37, %39, %cst_19 {dimension_numbers = #tpu.dot_dimension_numbers<[2], [2], [1], [1], [0, 0, 0, 1, 1, 1], [0], [0]>} : vector<2x8x8xf32>, vector<2x8x8xf32>, vector<2x8x8xf32> -> vector<2x8x8xf32>
    "tpu.trace_stop"() : () -> ()
    %43 = vector.broadcast %1 : vector<2x1x8xf32> to vector<2x8x8xf32>
    %44 = arith.addf %42, %43 : vector<2x8x8xf32>
    %cst_20 = arith.constant dense<0xFF800000> : vector<2x8xf32>
    %45 = vector.multi_reduction <maximumf>, %44, %cst_20 [2] : vector<2x8x8xf32> to vector<2x8xf32>
    %46 = vector.shape_cast %45 : vector<2x8xf32> to vector<2x8x1xf32>
    %47 = vector.broadcast %46 : vector<2x8x1xf32> to vector<2x8x8xf32>
    %48 = arith.subf %44, %47 : vector<2x8x8xf32>
    %49 = math.exp %48 : vector<2x8x8xf32>
    %cst_21 = arith.constant dense<0.000000e+00> : vector<2x8xf32>
    %50 = vector.multi_reduction <add>, %49, %cst_21 [2] : vector<2x8x8xf32> to vector<2x8xf32>
    %51 = vector.shape_cast %50 : vector<2x8xf32> to vector<2x8x1xf32>
    %52 = tpu.reciprocal %51 {approx = true} : vector<2x8x1xf32> -> vector<2x8x1xf32>
    %53 = vector.broadcast %52 : vector<2x8x1xf32> to vector<2x8x8xf32>
    %54 = arith.mulf %49, %53 : vector<2x8x8xf32>
    "tpu.trace_start"() <{level = 10 : i32, message = "bqk,bkd->bqd"}> : () -> ()
    %cst_22 = arith.constant dense<0.000000e+00> : vector<2x8x8xf32>
    %55 = tpu.matmul %54, %41, %cst_22 {dimension_numbers = #tpu.dot_dimension_numbers<[2], [1], [1], [2], [0, 0, 0, 1, 1, 2], [0], [0]>} : vector<2x8x8xf32>, vector<2x8x8xf32>, vector<2x8x8xf32> -> vector<2x8x8xf32>
    "tpu.trace_stop"() : () -> ()
    %56 = vector.extract_strided_slice %33 {offsets = [0, 8], sizes = [16, 8], strides = [1, 1]} : vector<16x96xf32> to vector<16x8xf32>
    %cst_23 = arith.constant 0.353553385 : f32
    %57 = vector.broadcast %cst_23 : f32 to vector<16x8xf32>
    %58 = arith.mulf %56, %57 : vector<16x8xf32>
    %59 = vector.shape_cast %58 : vector<16x8xf32> to vector<2x8x8xf32>
    %60 = vector.extract_strided_slice %33 {offsets = [0, 40], sizes = [16, 8], strides = [1, 1]} : vector<16x96xf32> to vector<16x8xf32>
    %61 = vector.shape_cast %60 : vector<16x8xf32> to vector<2x8x8xf32>
    %62 = vector.extract_strided_slice %33 {offsets = [0, 72], sizes = [16, 8], strides = [1, 1]} : vector<16x96xf32> to vector<16x8xf32>
    %63 = vector.shape_cast %62 : vector<16x8xf32> to vector<2x8x8xf32>
    "tpu.trace_start"() <{level = 10 : i32, message = "bqd,bkd->bqk"}> : () -> ()
    %cst_24 = arith.constant dense<0.000000e+00> : vector<2x8x8xf32>
    %64 = tpu.matmul %59, %61, %cst_24 {dimension_numbers = #tpu.dot_dimension_numbers<[2], [2], [1], [1], [0, 0, 0, 1, 1, 1], [0], [0]>} : vector<2x8x8xf32>, vector<2x8x8xf32>, vector<2x8x8xf32> -> vector<2x8x8xf32>
    "tpu.trace_stop"() : () -> ()
    %65 = vector.broadcast %1 : vector<2x1x8xf32> to vector<2x8x8xf32>
    %66 = arith.addf %64, %65 : vector<2x8x8xf32>
    %cst_25 = arith.constant dense<0xFF800000> : vector<2x8xf32>
    %67 = vector.multi_reduction <maximumf>, %66, %cst_25 [2] : vector<2x8x8xf32> to vector<2x8xf32>
    %68 = vector.shape_cast %67 : vector<2x8xf32> to vector<2x8x1xf32>
    %69 = vector.broadcast %68 : vector<2x8x1xf32> to vector<2x8x8xf32>
    %70 = arith.subf %66, %69 : vector<2x8x8xf32>
    %71 = math.exp %70 : vector<2x8x8xf32>
    %cst_26 = arith.constant dense<0.000000e+00> : vector<2x8xf32>
    %72 = vector.multi_reduction <add>, %71, %cst_26 [2] : vector<2x8x8xf32> to vector<2x8xf32>
    %73 = vector.shape_cast %72 : vector<2x8xf32> to vector<2x8x1xf32>
    %74 = tpu.reciprocal %73 {approx = true} : vector<2x8x1xf32> -> vector<2x8x1xf32>
    %75 = vector.broadcast %74 : vector<2x8x1xf32> to vector<2x8x8xf32>
    %76 = arith.mulf %71, %75 : vector<2x8x8xf32>
    "tpu.trace_start"() <{level = 10 : i32, message = "bqk,bkd->bqd"}> : () -> ()
    %cst_27 = arith.constant dense<0.000000e+00> : vector<2x8x8xf32>
    %77 = tpu.matmul %76, %63, %cst_27 {dimension_numbers = #tpu.dot_dimension_numbers<[2], [1], [1], [2], [0, 0, 0, 1, 1, 2], [0], [0]>} : vector<2x8x8xf32>, vector<2x8x8xf32>, vector<2x8x8xf32> -> vector<2x8x8xf32>
    "tpu.trace_stop"() : () -> ()
    %78 = vector.extract_strided_slice %33 {offsets = [0, 16], sizes = [16, 8], strides = [1, 1]} : vector<16x96xf32> to vector<16x8xf32>
    %cst_28 = arith.constant 0.353553385 : f32
    %79 = vector.broadcast %cst_28 : f32 to vector<16x8xf32>
    %80 = arith.mulf %78, %79 : vector<16x8xf32>
    %81 = vector.shape_cast %80 : vector<16x8xf32> to vector<2x8x8xf32>
    %82 = vector.extract_strided_slice %33 {offsets = [0, 48], sizes = [16, 8], strides = [1, 1]} : vector<16x96xf32> to vector<16x8xf32>
    %83 = vector.shape_cast %82 : vector<16x8xf32> to vector<2x8x8xf32>
    %84 = vector.extract_strided_slice %33 {offsets = [0, 80], sizes = [16, 8], strides = [1, 1]} : vector<16x96xf32> to vector<16x8xf32>
    %85 = vector.shape_cast %84 : vector<16x8xf32> to vector<2x8x8xf32>
    "tpu.trace_start"() <{level = 10 : i32, message = "bqd,bkd->bqk"}> : () -> ()
    %cst_29 = arith.constant dense<0.000000e+00> : vector<2x8x8xf32>
    %86 = tpu.matmul %81, %83, %cst_29 {dimension_numbers = #tpu.dot_dimension_numbers<[2], [2], [1], [1], [0, 0, 0, 1, 1, 1], [0], [0]>} : vector<2x8x8xf32>, vector<2x8x8xf32>, vector<2x8x8xf32> -> vector<2x8x8xf32>
    "tpu.trace_stop"() : () -> ()
    %87 = vector.broadcast %1 : vector<2x1x8xf32> to vector<2x8x8xf32>
    %88 = arith.addf %86, %87 : vector<2x8x8xf32>
    %cst_30 = arith.constant dense<0xFF800000> : vector<2x8xf32>
    %89 = vector.multi_reduction <maximumf>, %88, %cst_30 [2] : vector<2x8x8xf32> to vector<2x8xf32>
    %90 = vector.shape_cast %89 : vector<2x8xf32> to vector<2x8x1xf32>
    %91 = vector.broadcast %90 : vector<2x8x1xf32> to vector<2x8x8xf32>
    %92 = arith.subf %88, %91 : vector<2x8x8xf32>
    %93 = math.exp %92 : vector<2x8x8xf32>
    %cst_31 = arith.constant dense<0.000000e+00> : vector<2x8xf32>
    %94 = vector.multi_reduction <add>, %93, %cst_31 [2] : vector<2x8x8xf32> to vector<2x8xf32>
    %95 = vector.shape_cast %94 : vector<2x8xf32> to vector<2x8x1xf32>
    %96 = tpu.reciprocal %95 {approx = true} : vector<2x8x1xf32> -> vector<2x8x1xf32>
    %97 = vector.broadcast %96 : vector<2x8x1xf32> to vector<2x8x8xf32>
    %98 = arith.mulf %93, %97 : vector<2x8x8xf32>
    "tpu.trace_start"() <{level = 10 : i32, message = "bqk,bkd->bqd"}> : () -> ()
    %cst_32 = arith.constant dense<0.000000e+00> : vector<2x8x8xf32>
    %99 = tpu.matmul %98, %85, %cst_32 {dimension_numbers = #tpu.dot_dimension_numbers<[2], [1], [1], [2], [0, 0, 0, 1, 1, 2], [0], [0]>} : vector<2x8x8xf32>, vector<2x8x8xf32>, vector<2x8x8xf32> -> vector<2x8x8xf32>
    "tpu.trace_stop"() : () -> ()
    %100 = vector.extract_strided_slice %33 {offsets = [0, 24], sizes = [16, 8], strides = [1, 1]} : vector<16x96xf32> to vector<16x8xf32>
    %cst_33 = arith.constant 0.353553385 : f32
    %101 = vector.broadcast %cst_33 : f32 to vector<16x8xf32>
    %102 = arith.mulf %100, %101 : vector<16x8xf32>
    %103 = vector.shape_cast %102 : vector<16x8xf32> to vector<2x8x8xf32>
    %104 = vector.extract_strided_slice %33 {offsets = [0, 56], sizes = [16, 8], strides = [1, 1]} : vector<16x96xf32> to vector<16x8xf32>
    %105 = vector.shape_cast %104 : vector<16x8xf32> to vector<2x8x8xf32>
    %106 = vector.extract_strided_slice %33 {offsets = [0, 88], sizes = [16, 8], strides = [1, 1]} : vector<16x96xf32> to vector<16x8xf32>
    %107 = vector.shape_cast %106 : vector<16x8xf32> to vector<2x8x8xf32>
    "tpu.trace_start"() <{level = 10 : i32, message = "bqd,bkd->bqk"}> : () -> ()
    %cst_34 = arith.constant dense<0.000000e+00> : vector<2x8x8xf32>
    %108 = tpu.matmul %103, %105, %cst_34 {dimension_numbers = #tpu.dot_dimension_numbers<[2], [2], [1], [1], [0, 0, 0, 1, 1, 1], [0], [0]>} : vector<2x8x8xf32>, vector<2x8x8xf32>, vector<2x8x8xf32> -> vector<2x8x8xf32>
    "tpu.trace_stop"() : () -> ()
    %109 = vector.broadcast %1 : vector<2x1x8xf32> to vector<2x8x8xf32>
    %110 = arith.addf %108, %109 : vector<2x8x8xf32>
    %cst_35 = arith.constant dense<0xFF800000> : vector<2x8xf32>
    %111 = vector.multi_reduction <maximumf>, %110, %cst_35 [2] : vector<2x8x8xf32> to vector<2x8xf32>
    %112 = vector.shape_cast %111 : vector<2x8xf32> to vector<2x8x1xf32>
    %113 = vector.broadcast %112 : vector<2x8x1xf32> to vector<2x8x8xf32>
    %114 = arith.subf %110, %113 : vector<2x8x8xf32>
    %115 = math.exp %114 : vector<2x8x8xf32>
    %cst_36 = arith.constant dense<0.000000e+00> : vector<2x8xf32>
    %116 = vector.multi_reduction <add>, %115, %cst_36 [2] : vector<2x8x8xf32> to vector<2x8xf32>
    %117 = vector.shape_cast %116 : vector<2x8xf32> to vector<2x8x1xf32>
    %118 = tpu.reciprocal %117 {approx = true} : vector<2x8x1xf32> -> vector<2x8x1xf32>
    %119 = vector.broadcast %118 : vector<2x8x1xf32> to vector<2x8x8xf32>
    %120 = arith.mulf %115, %119 : vector<2x8x8xf32>
    "tpu.trace_start"() <{level = 10 : i32, message = "bqk,bkd->bqd"}> : () -> ()
    %cst_37 = arith.constant dense<0.000000e+00> : vector<2x8x8xf32>
    %121 = tpu.matmul %120, %107, %cst_37 {dimension_numbers = #tpu.dot_dimension_numbers<[2], [1], [1], [2], [0, 0, 0, 1, 1, 2], [0], [0]>} : vector<2x8x8xf32>, vector<2x8x8xf32>, vector<2x8x8xf32> -> vector<2x8x8xf32>
    "tpu.trace_stop"() : () -> ()
    %122 = tpu.concatenate %55, %77, %99, %121 in 2 : vector<2x8x8xf32>, vector<2x8x8xf32>, vector<2x8x8xf32>, vector<2x8x8xf32> -> vector<2x8x32xf32>
    %123 = vector.shape_cast %122 : vector<2x8x32xf32> to vector<16x32xf32>
    %c0_38 = arith.constant 0 : index
    %c0_39 = arith.constant 0 : index
    %124 = vector.load %arg7[%c0_38, %c0_39] : memref<32x32xf32, #tpu.memory_space<vmem>>, vector<32x32xf32>
    %cst_40 = arith.constant dense<0.000000e+00> : vector<16x32xf32>
    %125 = tpu.matmul %123, %124, %cst_40 {dimension_numbers = #tpu.dot_dimension_numbers<[1], [0], [0], [1], [0, 0, 1, 1], [], []>} : vector<16x32xf32>, vector<32x32xf32>, vector<16x32xf32> -> vector<16x32xf32>
    %c0_41 = arith.constant 0 : index
    %c0_42 = arith.constant 0 : index
    %126 = vector.load %arg8[%c0_41, %c0_42] : memref<1x32xf32, #tpu.memory_space<vmem>>, vector<1x32xf32>
    %127 = vector.broadcast %126 : vector<1x32xf32> to vector<16x32xf32>
    %128 = arith.addf %125, %127 : vector<16x32xf32>
    %129 = vector.shape_cast %128 : vector<16x32xf32> to vector<2x8x32xf32>
    %130 = arith.addf %0, %129 : vector<2x8x32xf32>
    %c0_43 = arith.constant 0 : index
    %c0_44 = arith.constant 0 : index
    %131 = vector.load %arg9[%c0_43, %c0_44] : memref<1x32xf32, #tpu.memory_space<vmem>>, vector<1x32xf32>
    %c0_45 = arith.constant 0 : index
    %c0_46 = arith.constant 0 : index
    %132 = vector.load %arg10[%c0_45, %c0_46] : memref<1x32xf32, #tpu.memory_space<vmem>>, vector<1x32xf32>
    %cst_47 = arith.constant dense<0.000000e+00> : vector<2x8xf32>
    %133 = vector.multi_reduction <add>, %130, %cst_47 [2] : vector<2x8x32xf32> to vector<2x8xf32>
    %134 = vector.shape_cast %133 : vector<2x8xf32> to vector<2x8x1xf32>
    %cst_48 = arith.constant 3.200000e+01 : f32
    %135 = vector.broadcast %cst_48 : f32 to vector<2x8x1xf32>
    %136 = arith.divf %134, %135 : vector<2x8x1xf32>
    %137 = vector.broadcast %136 : vector<2x8x1xf32> to vector<2x8x32xf32>
    %138 = arith.subf %130, %137 : vector<2x8x32xf32>
    %139 = arith.mulf %138, %138 : vector<2x8x32xf32>
    %cst_49 = arith.constant dense<0.000000e+00> : vector<2x8xf32>
    %140 = vector.multi_reduction <add>, %139, %cst_49 [2] : vector<2x8x32xf32> to vector<2x8xf32>
    %141 = vector.shape_cast %140 : vector<2x8xf32> to vector<2x8x1xf32>
    %cst_50 = arith.constant 3.200000e+01 : f32
    %142 = vector.broadcast %cst_50 : f32 to vector<2x8x1xf32>
    %143 = arith.divf %141, %142 : vector<2x8x1xf32>
    %144 = vector.broadcast %136 : vector<2x8x1xf32> to vector<2x8x32xf32>
    %145 = arith.subf %130, %144 : vector<2x8x32xf32>
    %cst_51 = arith.constant 9.99999974E-6 : f32
    %146 = vector.broadcast %cst_51 : f32 to vector<2x8x1xf32>
    %147 = arith.addf %143, %146 : vector<2x8x1xf32>
    %148 = math.rsqrt %147 : vector<2x8x1xf32>
    %149 = vector.broadcast %148 : vector<2x8x1xf32> to vector<2x8x32xf32>
    %150 = arith.mulf %145, %149 : vector<2x8x32xf32>
    %151 = vector.shape_cast %131 : vector<1x32xf32> to vector<1x1x32xf32>
    %152 = vector.broadcast %151 : vector<1x1x32xf32> to vector<2x8x32xf32>
    %153 = arith.mulf %150, %152 : vector<2x8x32xf32>
    %154 = vector.shape_cast %132 : vector<1x32xf32> to vector<1x1x32xf32>
    %155 = vector.broadcast %154 : vector<1x1x32xf32> to vector<2x8x32xf32>
    %156 = arith.addf %153, %155 : vector<2x8x32xf32>
    %157 = vector.shape_cast %156 : vector<2x8x32xf32> to vector<16x32xf32>
    %c0_52 = arith.constant 0 : index
    %c0_53 = arith.constant 0 : index
    %158 = vector.load %arg11[%c0_52, %c0_53] : memref<32x64xf32, #tpu.memory_space<vmem>>, vector<32x64xf32>
    %cst_54 = arith.constant dense<0.000000e+00> : vector<16x64xf32>
    %159 = tpu.matmul %157, %158, %cst_54 {dimension_numbers = #tpu.dot_dimension_numbers<[1], [0], [0], [1], [0, 0, 1, 1], [], []>} : vector<16x32xf32>, vector<32x64xf32>, vector<16x64xf32> -> vector<16x64xf32>
    %c0_55 = arith.constant 0 : index
    %c0_56 = arith.constant 0 : index
    %160 = vector.load %arg12[%c0_55, %c0_56] : memref<1x64xf32, #tpu.memory_space<vmem>>, vector<1x64xf32>
    %161 = vector.broadcast %160 : vector<1x64xf32> to vector<16x64xf32>
    %162 = arith.addf %159, %161 : vector<16x64xf32>
    %cst_57 = arith.constant 0.000000e+00 : f32
    %163 = vector.broadcast %cst_57 : f32 to vector<16x64xf32>
    %164 = arith.maximumf %162, %163 : vector<16x64xf32>
    %c0_58 = arith.constant 0 : index
    %c0_59 = arith.constant 0 : index
    %165 = vector.load %arg13[%c0_58, %c0_59] : memref<64x32xf32, #tpu.memory_space<vmem>>, vector<64x32xf32>
    %cst_60 = arith.constant dense<0.000000e+00> : vector<16x32xf32>
    %166 = tpu.matmul %164, %165, %cst_60 {dimension_numbers = #tpu.dot_dimension_numbers<[1], [0], [0], [1], [0, 0, 1, 1], [], []>} : vector<16x64xf32>, vector<64x32xf32>, vector<16x32xf32> -> vector<16x32xf32>
    %c0_61 = arith.constant 0 : index
    %c0_62 = arith.constant 0 : index
    %167 = vector.load %arg14[%c0_61, %c0_62] : memref<1x32xf32, #tpu.memory_space<vmem>>, vector<1x32xf32>
    %168 = vector.broadcast %167 : vector<1x32xf32> to vector<16x32xf32>
    %169 = arith.addf %166, %168 : vector<16x32xf32>
    %170 = vector.shape_cast %169 : vector<16x32xf32> to vector<2x8x32xf32>
    %171 = arith.addf %130, %170 : vector<2x8x32xf32>
    %c0_63 = arith.constant 0 : index
    %c0_64 = arith.constant 0 : index
    %c0_65 = arith.constant 0 : index
    %172 = vector.load %arg15[%c0_63, %c0_64, %c0_65] : memref<2x8x32xf32, #tpu.memory_space<vmem>>, vector<2x8x32xf32>
    tpu.vector_store %arg15[%c0_63, %c0_64, %c0_65], %171 {strides = array<i32>} : memref<2x8x32xf32, #tpu.memory_space<vmem>>, vector<2x8x32xf32>,
    return
  }
  func.func @transform_0(%arg0: i32) -> (i32, i32, i32) {
    %c0_i32 = arith.constant 0 : i32
    %c0_i32_0 = arith.constant 0 : i32
    %c0_i32_1 = arith.constant 0 : i32
    return %arg0, %c0_i32, %c0_i32_0 : i32, i32, i32
  }
  func.func @transform_1(%arg0: i32) -> (i32, i32, i32) {
    %c0_i32 = arith.constant 0 : i32
    %c0_i32_0 = arith.constant 0 : i32
    %c0_i32_1 = arith.constant 0 : i32
    return %arg0, %c0_i32, %c0_i32_0 : i32, i32, i32
  }
  func.func @transform_2(%arg0: i32) -> (i32, i32) {
    %c0_i32 = arith.constant 0 : i32
    %c0_i32_0 = arith.constant 0 : i32
    %c0_i32_1 = arith.constant 0 : i32
    return %c0_i32, %c0_i32_0 : i32, i32
  }
  func.func @transform_3(%arg0: i32) -> (i32, i32) {
    %c0_i32 = arith.constant 0 : i32
    %c0_i32_0 = arith.constant 0 : i32
    %c0_i32_1 = arith.constant 0 : i32
    return %c0_i32, %c0_i32_0 : i32, i32
  }
  func.func @transform_4(%arg0: i32) -> (i32, i32) {
    %c0_i32 = arith.constant 0 : i32
    %c0_i32_0 = arith.constant 0 : i32
    %c0_i32_1 = arith.constant 0 : i32
    return %c0_i32, %c0_i32_0 : i32, i32
  }
  func.func @transform_5(%arg0: i32) -> (i32, i32) {
    %c0_i32 = arith.constant 0 : i32
    %c0_i32_0 = arith.constant 0 : i32
    %c0_i32_1 = arith.constant 0 : i32
    return %c0_i32, %c0_i32_0 : i32, i32
  }
  func.func @transform_6(%arg0: i32) -> (i32, i32) {
    %c0_i32 = arith.constant 0 : i32
    %c0_i32_0 = arith.constant 0 : i32
    %c0_i32_1 = arith.constant 0 : i32
    return %c0_i32, %c0_i32_0 : i32, i32
  }
  func.func @transform_7(%arg0: i32) -> (i32, i32) {
    %c0_i32 = arith.constant 0 : i32
    %c0_i32_0 = arith.constant 0 : i32
    %c0_i32_1 = arith.constant 0 : i32
    return %c0_i32, %c0_i32_0 : i32, i32
  }
  func.func @transform_8(%arg0: i32) -> (i32, i32) {
    %c0_i32 = arith.constant 0 : i32
    %c0_i32_0 = arith.constant 0 : i32
    %c0_i32_1 = arith.constant 0 : i32
    return %c0_i32, %c0_i32_0 : i32, i32
  }
  func.func @transform_9(%arg0: i32) -> (i32, i32) {
    %c0_i32 = arith.constant 0 : i32
    %c0_i32_0 = arith.constant 0 : i32
    %c0_i32_1 = arith.constant 0 : i32
    return %c0_i32, %c0_i32_0 : i32, i32
  }
  func.func @transform_10(%arg0: i32) -> (i32, i32) {
    %c0_i32 = arith.constant 0 : i32
    %c0_i32_0 = arith.constant 0 : i32
    %c0_i32_1 = arith.constant 0 : i32
    return %c0_i32, %c0_i32_0 : i32, i32
  }
  func.func @transform_11(%arg0: i32) -> (i32, i32) {
    %c0_i32 = arith.constant 0 : i32
    %c0_i32_0 = arith.constant 0 : i32
    %c0_i32_1 = arith.constant 0 : i32
    return %c0_i32, %c0_i32_0 : i32, i32
  }
  func.func @transform_12(%arg0: i32) -> (i32, i32) {
    %c0_i32 = arith.constant 0 : i32
    %c0_i32_0 = arith.constant 0 : i32
    %c0_i32_1 = arith.constant 0 : i32
    return %c0_i32, %c0_i32_0 : i32, i32
  }
  func.func @transform_13(%arg0: i32) -> (i32, i32) {
    %c0_i32 = arith.constant 0 : i32
    %c0_i32_0 = arith.constant 0 : i32
    %c0_i32_1 = arith.constant 0 : i32
    return %c0_i32, %c0_i32_0 : i32, i32
  }
  func.func @transform_14(%arg0: i32) -> (i32, i32, i32) {
    %c0_i32 = arith.constant 0 : i32
    %c0_i32_0 = arith.constant 0 : i32
    %c0_i32_1 = arith.constant 0 : i32
    return %arg0, %c0_i32, %c0_i32_0 : i32, i32, i32
  }
}

</mosaic_0001>

<llo_original>
// kernel: extraction_preln_transformer.2
$region0: #{extraction_preln_transformer.2}
  #allocation0 [shape = 'u32[]', space=smem, size = 0x4, offset = 0x4, fixed_abs, tag = 'smem constant byte address 0x4 - core index']
  #allocation1 [shape = 'u32[72,128]{1,0:T(1,128)}', space=vmem, size = 0x9000, scoped, tag = 'internal scratch']
  %s0 = inlined_call_operand.vmem [shape: f32[2,8,32], index: 0, kind: input, shape index: {}]
  %s1 = inlined_call_operand.vmem [shape: f32[2,1,8], index: 1, kind: input, shape index: {}]
  %s2 = inlined_call_operand.vmem [shape: f32[1,32], index: 2, kind: input, shape index: {}]
  %s3 = inlined_call_operand.vmem [shape: f32[1,32], index: 3, kind: input, shape index: {}]
  %s4 = inlined_call_operand.vmem [shape: f32[32,96], index: 4, kind: input, shape index: {}]
  %s5 = inlined_call_operand.vmem [shape: f32[1,96], index: 5, kind: input, shape index: {}]
  %s6 = inlined_call_operand.vmem [shape: f32[32,32], index: 6, kind: input, shape index: {}]
  %s7 = inlined_call_operand.hbm [shape: f32[1,32], index: 7, kind: input, shape index: {}]
  %s8 = inlined_call_operand.hbm [shape: f32[1,32], index: 8, kind: input, shape index: {}]
  %s9 = inlined_call_operand.hbm [shape: f32[1,32], index: 9, kind: input, shape index: {}]
  %s10 = inlined_call_operand.hbm [shape: f32[32,64], index: 10, kind: input, shape index: {}]
  %s11 = inlined_call_operand.hbm [shape: f32[1,64], index: 11, kind: input, shape index: {}]
  %s12 = inlined_call_operand.vmem [shape: f32[64,32], index: 12, kind: input, shape index: {}]
  %s13 = inlined_call_operand.hbm [shape: f32[1,32], index: 13, kind: input, shape index: {}]
  %s14 = inlined_call_operand.vmem [shape: f32[2,8,32], index: 14, kind: output, shape index: {}]
  %s15 = sld [smem:[#allocation0]]
  $region90: #{extraction_preln_transformer.2} parent=0
    _
  %s17 = ssub.s32 1, %s15
  %s18 = scalar_select 0, %s17, %s15
  $region1: #{extraction_preln_transformer.2} parent=0
    #allocation2 [shape = 'u8[512]{0}', space=vmem, size = 0x400, scoped, tag = 'input window, operand 7, single buffered']
    #allocation3 [shape = 's32[1]{0}', space=sflag, size = 0x4, scoped, tag = 'scoped memory for extraction_preln_transformer.2']
    #allocation4 [shape = 'u8[512]{0}', space=vmem, size = 0x400, scoped, tag = 'input window, operand 8, single buffered']
    #allocation5 [shape = 's32[1]{0}', space=sflag, size = 0x4, scoped, tag = 'scoped memory for extraction_preln_transformer.2']
    #allocation6 [shape = 'u8[512]{0}', space=vmem, size = 0x400, scoped, tag = 'input window, operand 9, single buffered']
    #allocation7 [shape = 'u8[16384]{0}', space=vmem, size = 0x4000, scoped, tag = 'input window, operand 10, single buffered']
    #allocation8 [shape = 's32[1]{0}', space=sflag, size = 0x4, scoped, tag = 'scoped memory for extraction_preln_transformer.2']
    #allocation9 [shape = 'u8[512]{0}', space=vmem, size = 0x400, scoped, tag = 'input window, operand 11, single buffered']
    #allocation10 [shape = 'u8[512]{0}', space=vmem, size = 0x400, scoped, tag = 'input window, operand 13, single buffered']
    #allocation11 [shape = 's32[1]{0}', space=sflag, size = 0x4, scoped, tag = 'scoped memory for extraction_preln_transformer.2']
    %19 = vsyncpa [#allocation3], 0
    %20 = vsyncpa [#allocation5], 0
    %21 = vsyncpa [#allocation8], 0
    %22 = vsyncpa [#allocation11], 0
    // Predicated region
    $region2: #{extraction_preln_transformer.2} parent=1 // pred_check
      _
    $region3: #{extraction_preln_transformer.2} parent=1 // pred_check_branch
      %24 = sbr.rel (0) target = $region5
    $region4: #{extraction_preln_transformer.2} parent=1 // pred_region
      _
    $region5: #{extraction_preln_transformer.2} parent=1 // pred_fallthru
      _
    // Predicated region
    $region6: #{extraction_preln_transformer.2} parent=1 // pred_check
      _
    $region7: #{extraction_preln_transformer.2} parent=1 // pred_check_branch
      %26 = sbr.rel (0) target = $region9
    $region8: #{extraction_preln_transformer.2} parent=1 // pred_region
      _
    $region9: #{extraction_preln_transformer.2} parent=1 // pred_fallthru
      _
    // Predicated region
    $region10: #{extraction_preln_transformer.2} parent=1 // pred_check
      _
    $region11: #{extraction_preln_transformer.2} parent=1 // pred_check_branch
      %28 = sbr.rel (0) target = $region13
    $region12: #{extraction_preln_transformer.2} parent=1 // pred_region
      _
    $region13: #{extraction_preln_transformer.2} parent=1 // pred_fallthru
      _
    // Predicated region
    $region14: #{extraction_preln_transformer.2} parent=1 // pred_check
      _
    $region15: #{extraction_preln_transformer.2} parent=1 // pred_check_branch
      %30 = sbr.rel (0) target = $region17
    $region16: #{extraction_preln_transformer.2} parent=1 // pred_region
      _
    $region17: #{extraction_preln_transformer.2} parent=1 // pred_fallthru
      _
    // Predicated region
    $region18: #{extraction_preln_transformer.2} parent=1 // pred_check
      _
    $region19: #{extraction_preln_transformer.2} parent=1 // pred_check_branch
      %32 = sbr.rel (0) target = $region21
    $region20: #{extraction_preln_transformer.2} parent=1 // pred_region
      _
    $region21: #{extraction_preln_transformer.2} parent=1 // pred_fallthru
      _
    // Predicated region
    $region22: #{extraction_preln_transformer.2} parent=1 // pred_check
      _
    $region23: #{extraction_preln_transformer.2} parent=1 // pred_check_branch
      %34 = sbr.rel (0) target = $region25
    $region24: #{extraction_preln_transformer.2} parent=1 // pred_region
      _
    $region25: #{extraction_preln_transformer.2} parent=1 // pred_fallthru
      _
    // Predicated region
    $region26: #{extraction_preln_transformer.2} parent=1 // pred_check
      _
    $region27: #{extraction_preln_transformer.2} parent=1 // pred_check_branch
      %36 = sbr.rel (0) target = $region29
    $region28: #{extraction_preln_transformer.2} parent=1 // pred_region
      _
    $region29: #{extraction_preln_transformer.2} parent=1 // pred_fallthru
      _
    // Predicated region
    $region30: #{extraction_preln_transformer.2} parent=1 // pred_check
      _
    $region31: #{extraction_preln_transformer.2} parent=1 // pred_check_branch
      %38 = sbr.rel (0) target = $region33
    $region32: #{extraction_preln_transformer.2} parent=1 // pred_region
      %40 = vsyncadd [#allocation3], 0
      %s42 = sshll.u32 %s7, 4
      %s43 = int_to_ptr.hbm [resolvable:$true] %s42
      %s44 = sshll.u32 [#allocation2], 4
      %s45 = int_to_ptr.vmem [resolvable:$true] %s44
      %47 = dma.hbm_to_vmem [thread:$0]  %s43, 16, %s45, [#allocation3]
    $region33: #{extraction_preln_transformer.2} parent=1 // pred_fallthru
      _
    // Predicated region
    $region34: #{extraction_preln_transformer.2} parent=1 // pred_check
      _
    $region35: #{extraction_preln_transformer.2} parent=1 // pred_check_branch
      %49 = sbr.rel (0) target = $region37
    $region36: #{extraction_preln_transformer.2} parent=1 // pred_region
      %51 = vsyncadd [#allocation5], 0
      %s53 = sshll.u32 %s8, 4
      %s54 = int_to_ptr.hbm [resolvable:$true] %s53
      %s55 = sshll.u32 [#allocation4], 4
      %s56 = int_to_ptr.vmem [resolvable:$true] %s55
      %58 = dma.hbm_to_vmem [thread:$0]  %s54, 16, %s56, [#allocation5]
    $region37: #{extraction_preln_transformer.2} parent=1 // pred_fallthru
      _
    // Predicated region
    $region38: #{extraction_preln_transformer.2} parent=1 // pred_check
      _
    $region39: #{extraction_preln_transformer.2} parent=1 // pred_check_branch
      %60 = sbr.rel (0) target = $region41
    $region40: #{extraction_preln_transformer.2} parent=1 // pred_region
      %62 = vsyncadd [#allocation5], 0
      %s64 = sshll.u32 %s9, 4
      %s65 = int_to_ptr.hbm [resolvable:$true] %s64
      %s66 = sshll.u32 [#allocation6], 4
      %s67 = int_to_ptr.vmem [resolvable:$true] %s66
      %69 = dma.hbm_to_vmem [thread:$0]  %s65, 16, %s67, [#allocation5]
    $region41: #{extraction_preln_transformer.2} parent=1 // pred_fallthru
      _
    // Predicated region
    $region42: #{extraction_preln_transformer.2} parent=1 // pred_check
      _
    $region43: #{extraction_preln_transformer.2} parent=1 // pred_check_branch
      %71 = sbr.rel (0) target = $region45
    $region44: #{extraction_preln_transformer.2} parent=1 // pred_region
      %73 = vsyncadd [#allocation8], 0
      %s74 = sshll.u32 %s10, 4
      %s75 = int_to_ptr.hbm [resolvable:$true] %s74
      %s76 = sshll.u32 [#allocation7], 4
      %s77 = int_to_ptr.vmem [resolvable:$true] %s76
      %82 = dma.hbm_to_vmem [thread:$0]  %s75, 512, %s77, [#allocation8], 128, 128, 8
    $region45: #{extraction_preln_transformer.2} parent=1 // pred_fallthru
      _
    // Predicated region
    $region46: #{extraction_preln_transformer.2} parent=1 // pred_check
      _
    $region47: #{extraction_preln_transformer.2} parent=1 // pred_check_branch
      %84 = sbr.rel (0) target = $region49
    $region48: #{extraction_preln_transformer.2} parent=1 // pred_region
      %86 = vsyncadd [#allocation8], 0
      %s88 = sshll.u32 %s11, 4
      %s89 = int_to_ptr.hbm [resolvable:$true] %s88
      %s90 = sshll.u32 [#allocation9], 4
      %s91 = int_to_ptr.vmem [resolvable:$true] %s90
      %93 = dma.hbm_to_vmem [thread:$0]  %s89, 16, %s91, [#allocation8]
    $region49: #{extraction_preln_transformer.2} parent=1 // pred_fallthru
      _
    // Predicated region
    $region50: #{extraction_preln_transformer.2} parent=1 // pred_check
      _
    $region51: #{extraction_preln_transformer.2} parent=1 // pred_check_branch
      %95 = sbr.rel (0) target = $region53
    $region52: #{extraction_preln_transformer.2} parent=1 // pred_region
      _
    $region53: #{extraction_preln_transformer.2} parent=1 // pred_fallthru
      _
    // Predicated region
    $region54: #{extraction_preln_transformer.2} parent=1 // pred_check
      _
    $region55: #{extraction_preln_transformer.2} parent=1 // pred_check_branch
      %97 = sbr.rel (0) target = $region57
    $region56: #{extraction_preln_transformer.2} parent=1 // pred_region
      %99 = vsyncadd [#allocation11], 0
      %s101 = sshll.u32 %s13, 4
      %s102 = int_to_ptr.hbm [resolvable:$true] %s101
      %s103 = sshll.u32 [#allocation10], 4
      %s104 = int_to_ptr.vmem [resolvable:$true] %s103
      %106 = dma.hbm_to_vmem [thread:$0]  %s102, 16, %s104, [#allocation11]
    $region57: #{extraction_preln_transformer.2} parent=1 // pred_fallthru
      _
    // Predicated region
    $region58: #{extraction_preln_transformer.2} parent=1 // pred_check
      _
    $region59: #{extraction_preln_transformer.2} parent=1 // pred_check_branch
      %108 = sbr.rel (0) target = $region61
    $region60: #{extraction_preln_transformer.2} parent=1 // pred_region
      %110 = dma.done [#allocation3], 16
    $region61: #{extraction_preln_transformer.2} parent=1 // pred_fallthru
      _
    // Predicated region
    $region62: #{extraction_preln_transformer.2} parent=1 // pred_check
      _
    $region63: #{extraction_preln_transformer.2} parent=1 // pred_check_branch
      %112 = sbr.rel (0) target = $region65
    $region64: #{extraction_preln_transformer.2} parent=1 // pred_region
      %114 = dma.done [#allocation5], 16
    $region65: #{extraction_preln_transformer.2} parent=1 // pred_fallthru
      _
    // Predicated region
    $region66: #{extraction_preln_transformer.2} parent=1 // pred_check
      _
    $region67: #{extraction_preln_transformer.2} parent=1 // pred_check_branch
      %116 = sbr.rel (0) target = $region69
    $region68: #{extraction_preln_transformer.2} parent=1 // pred_region
      %118 = dma.done [#allocation5], 16
    $region69: #{extraction_preln_transformer.2} parent=1 // pred_fallthru
      _
    // Predicated region
    $region70: #{extraction_preln_transformer.2} parent=1 // pred_check
      _
    $region71: #{extraction_preln_transformer.2} parent=1 // pred_check_branch
      %120 = sbr.rel (0) target = $region73
    $region72: #{extraction_preln_transformer.2} parent=1 // pred_region
      %122 = dma.done [#allocation8], 512
    $region73: #{extraction_preln_transformer.2} parent=1 // pred_fallthru
      _
    // Predicated region
    $region74: #{extraction_preln_transformer.2} parent=1 // pred_check
      _
    $region75: #{extraction_preln_transformer.2} parent=1 // pred_check_branch
      %124 = sbr.rel (0) target = $region77
    $region76: #{extraction_preln_transformer.2} parent=1 // pred_region
      %126 = dma.done [#allocation8], 16
    $region77: #{extraction_preln_transformer.2} parent=1 // pred_fallthru
      _
    // Predicated region
    $region78: #{extraction_preln_transformer.2} parent=1 // pred_check
      _
    $region79: #{extraction_preln_transformer.2} parent=1 // pred_check_branch
      %128 = sbr.rel (0) target = $region81
    $region80: #{extraction_preln_transformer.2} parent=1 // pred_region
      %130 = dma.done [#allocation11], 16
    $region81: #{extraction_preln_transformer.2} parent=1 // pred_fallthru
      _
    %v131 = vld [vmem:[%s0] sm:$0xff]
    %v132 = vld [vmem:[%s0 + $0x8] sm:$0xff]
    %v133 = vld [vmem:[%s1] sm:$0x1]
    %v134 = vld [vmem:[%s1 + $0x1] sm:$0x1]
    %v135 = vld [vmem:[%s2] sm:$0x1]
    %v136 = vld [vmem:[%s3] sm:$0x1]
    %vm137 = vcmask 261120
    %v138 = vsel %vm137, %v131, 0.0
    %139 = vadd.xlane.f32.xlu0 %v138
    %v140 = vpop.xlane.xlu0 %139
    %v141 = vsel %vm137, %v132, 0.0
    %142 = vadd.xlane.f32.xlu0 %v141
    %v143 = vpop.xlane.xlu0 %142
    %v144 = vrcp.pop 32.0
    %v145 = vmul.f32 32.0, %v144
    %v146 = vsub.f32 1.0, %v145
    %v147 = vmul.f32 %v144, %v146
    %v148 = vadd.f32 %v144, %v147
    %vm149 = vweird.f32 %v144
    %v150 = vsel %vm149, %v144, %v148
    %v151 = vmul.f32 %v140, %v150
    %v152 = vmul.f32 %v143, %v150
    %v153 = vsub.f32 %v131, %v151
    %v154 = vsub.f32 %v132, %v152
    %v155 = vmul.f32 %v153, %v153
    %v156 = vmul.f32 %v154, %v154
    %v157 = vsel %vm137, %v155, 0.0
    %158 = vadd.xlane.f32.xlu0 %v157
    %v159 = vpop.xlane.xlu0 %158
    %v160 = vsel %vm137, %v156, 0.0
    %161 = vadd.xlane.f32.xlu0 %v160
    %v162 = vpop.xlane.xlu0 %161
    %v163 = vmul.f32 %v159, %v150
    %v164 = vmul.f32 %v162, %v150
    %v165 = vadd.f32 %v163, 1e-05
    %v166 = vadd.f32 %v164, 1e-05
    %v167 = vrsqrt.pop %v165
    %v168 = vmul.f32 %v167, %v165
    %v169 = vmul.f32 %v168, %v167
    %v170 = vmul.f32 0.5, %v169
    %v171 = vsub.f32 1.5, %v170
    %v172 = vmul.f32 %v167, %v171
    %vm173 = vweird.f32 %v165
    %vm174 = vweird.f32 %v167
    %vm175 = vmor %vm173, %vm174
    %v176 = vsel %vm175, %v167, %v172
    %v177 = vrsqrt.pop %v166
    %v178 = vmul.f32 %v177, %v166
    %v179 = vmul.f32 %v178, %v177
    %v180 = vmul.f32 0.5, %v179
    %v181 = vsub.f32 1.5, %v180
    %v182 = vmul.f32 %v177, %v181
    %vm183 = vweird.f32 %v166
    %vm184 = vweird.f32 %v177
    %vm185 = vmor %vm183, %vm184
    %v186 = vsel %vm185, %v177, %v182
    %v187 = vmul.f32 %v153, %v176
    %v188 = vmul.f32 %v154, %v186
    %v190 = vperm.slane %v135, 0
    %v192 = vmul.f32 %v187, %v190
    %v193 = vmul.f32 %v188, %v190
    %v195 = vperm.slane %v136, 0
    %v197 = vadd.f32 %v192, %v195
    %v198 = vadd.f32 %v193, %v195
    %v199 = vld [vmem:[%s4] sm:$0xff]
    %v200 = vld [vmem:[%s4 + $0x8] sm:$0xff]
    %v201 = vld [vmem:[%s4 + $0x10] sm:$0xff]
    %v202 = vld [vmem:[%s4 + $0x18] sm:$0xff]
    %v203 = vld [vmem:[%s5] sm:$0x1]
    %v205 = vperm.slane %v203, 0
    %v208 = vsel %vm137, %v197, 0
    %v211 = vsel %vm137, %v198, 0
    %213 = vmatpush.msra.mxu0 0.0
    %214 = vmatpush.msra.mxu0 0.0
    %215 = vmatpush.msra.mxu0 0.0
    %216 = vmatpush.msra.mxu0 0.0
    %217 = vmatpush.msra.mxu0 0.0
    %218 = vmatpush.msra.mxu0 0.0
    %219 = vmatpush.msra.mxu0 0.0
    %220 = vmatpush.msra.mxu0 0.0
    %221 = vmatpush.msra.mxu0 0.0
    %222 = vmatpush.msra.mxu0 0.0
    %223 = vmatpush.msra.mxu0 0.0
    %224 = vmatpush.msra.mxu0 0.0
    %225 = vmatpush.msra.mxu0 %v202
    %226 = vmatpush.msra.mxu0 %v201
    %227 = vmatpush.msra.mxu0 %v200
    %228 = vmatpush.msra.mxu0 %v199
    %229 = vmatmul.f32.gmra.mxu0 %v208
    %v230 = vpop.f32.mrf.mxu0
    %v231 = vadd.f32 %v205, %v230
    %232 = vmatmul.f32.gmra.mxu0 %v211
    %v233 = vpop.f32.mrf.mxu0
    %v234 = vadd.f32 %v205, %v233
    %235 = vdwg.mxu0
    %v236 = vmul.f32 %v231, 0.35355338
    %v237 = vmul.f32 %v234, 0.35355338
    %v240 = vperm.slane %v133, 0
    %v241 = vperm.slane %v134, 0
    %245 = vrot.lane.b32.xlu0 %v231, 96
    %v246 = vpop.permute.xlu0 %245
    %vm247 = vcmask 64512
    %v249 = vsel %vm247, %v236, 0
    %v251 = vsel %vm247, %v246, 0
    %253 = vmatpush.xpose.msra.mxu0 0.0
    %254 = vmatpush.xpose.msra.mxu0 0.0
    %255 = vmatpush.xpose.msra.mxu0 0.0
    %256 = vmatpush.xpose.msra.mxu0 0.0
    %257 = vmatpush.xpose.msra.mxu0 0.0
    %258 = vmatpush.xpose.msra.mxu0 0.0
    %259 = vmatpush.xpose.msra.mxu0 0.0
    %260 = vmatpush.xpose.msra.mxu0 0.0
    %261 = vmatpush.xpose.msra.mxu0 0.0
    %262 = vmatpush.xpose.msra.mxu0 0.0
    %263 = vmatpush.xpose.msra.mxu0 0.0
    %264 = vmatpush.xpose.msra.mxu0 0.0
    %265 = vmatpush.xpose.msra.mxu0 0.0
    %266 = vmatpush.xpose.msra.mxu0 0.0
    %267 = vmatpush.xpose.msra.mxu0 0.0
    %268 = vmatpush.xpose.msra.mxu0 %v251
    %269 = vmatmul.f32.gmra.mxu0 %v249
    %v270 = vpop.f32.mrf.mxu0
    %v271 = vadd.f32 %v240, %v270
    %272 = vdwg.mxu0
    %274 = vrot.lane.b32.xlu0 %v234, 96
    %v275 = vpop.permute.xlu0 %274
    %v277 = vsel %vm247, %v237, 0
    %v279 = vsel %vm247, %v275, 0
    %281 = vmatpush.xpose.msra.mxu0 0.0
    %282 = vmatpush.xpose.msra.mxu0 0.0
    %283 = vmatpush.xpose.msra.mxu0 0.0
    %284 = vmatpush.xpose.msra.mxu0 0.0
    %285 = vmatpush.xpose.msra.mxu0 0.0
    %286 = vmatpush.xpose.msra.mxu0 0.0
    %287 = vmatpush.xpose.msra.mxu0 0.0
    %288 = vmatpush.xpose.msra.mxu0 0.0
    %289 = vmatpush.xpose.msra.mxu0 0.0
    %290 = vmatpush.xpose.msra.mxu0 0.0
    %291 = vmatpush.xpose.msra.mxu0 0.0
    %292 = vmatpush.xpose.msra.mxu0 0.0
    %293 = vmatpush.xpose.msra.mxu0 0.0
    %294 = vmatpush.xpose.msra.mxu0 0.0
    %295 = vmatpush.xpose.msra.mxu0 0.0
    %296 = vmatpush.xpose.msra.mxu0 %v279
    %297 = vmatmul.f32.gmra.mxu0 %v277
    %v298 = vpop.f32.mrf.mxu0
    %v299 = vadd.f32 %v241, %v298
    %300 = vdwg.mxu0
    %v301 = vsel %vm247, %v271, -inf
    %302 = vmax.xlane.f32.xlu0 %v301
    %v303 = vpop.xlane.xlu0 %302
    %v304 = vsel %vm247, %v299, -inf
    %305 = vmax.xlane.f32.xlu0 %v304
    %v306 = vpop.xlane.xlu0 %305
    %v307 = vsub.f32 %v271, %v303
    %v308 = vsub.f32 %v299, %v306
    %v309 = vmul.f32 %v307, 1.442695
    %v310 = vpow.pop %v309
    %v311 = vmul.f32 %v308, 1.442695
    %v312 = vpow.pop %v311
    %v313 = vsel %vm247, %v310, 0.0
    %314 = vadd.xlane.f32.xlu0 %v313
    %v315 = vpop.xlane.xlu0 %314
    %v316 = vsel %vm247, %v312, 0.0
    %317 = vadd.xlane.f32.xlu0 %v316
    %v318 = vpop.xlane.xlu0 %317
    %v319 = vrcp.pop %v315
    %v320 = vrcp.pop %v318
    %v321 = vmul.f32 %v310, %v319
    %v322 = vmul.f32 %v312, %v320
    %323 = vrot.lane.b32.xlu0 %v231, 64
    %v324 = vpop.permute.xlu0 %323
    %v327 = vsel %vm247, %v321, 0
    %329 = vmatpush.msra.mxu0 0.0
    %330 = vmatpush.msra.mxu0 0.0
    %331 = vmatpush.msra.mxu0 0.0
    %332 = vmatpush.msra.mxu0 0.0
    %333 = vmatpush.msra.mxu0 0.0
    %334 = vmatpush.msra.mxu0 0.0
    %335 = vmatpush.msra.mxu0 0.0
    %336 = vmatpush.msra.mxu0 0.0
    %337 = vmatpush.msra.mxu0 0.0
    %338 = vmatpush.msra.mxu0 0.0
    %339 = vmatpush.msra.mxu0 0.0
    %340 = vmatpush.msra.mxu0 0.0
    %341 = vmatpush.msra.mxu0 0.0
    %342 = vmatpush.msra.mxu0 0.0
    %343 = vmatpush.msra.mxu0 0.0
    %344 = vmatpush.msra.mxu0 %v324
    %345 = vmatmul.f32.gmra.mxu0 %v327
    %v346 = vpop.f32.mrf.mxu0
    %v347 = vadd.f32 0.0, %v346
    %348 = vdwg.mxu0
    %349 = vrot.lane.b32.xlu0 %v234, 64
    %v350 = vpop.permute.xlu0 %349
    %v353 = vsel %vm247, %v322, 0
    %355 = vmatpush.msra.mxu0 0.0
    %356 = vmatpush.msra.mxu0 0.0
    %357 = vmatpush.msra.mxu0 0.0
    %358 = vmatpush.msra.mxu0 0.0
    %359 = vmatpush.msra.mxu0 0.0
    %360 = vmatpush.msra.mxu0 0.0
    %361 = vmatpush.msra.mxu0 0.0
    %362 = vmatpush.msra.mxu0 0.0
    %363 = vmatpush.msra.mxu0 0.0
    %364 = vmatpush.msra.mxu0 0.0
    %365 = vmatpush.msra.mxu0 0.0
    %366 = vmatpush.msra.mxu0 0.0
    %367 = vmatpush.msra.mxu0 0.0
    %368 = vmatpush.msra.mxu0 0.0
    %369 = vmatpush.msra.mxu0 0.0
    %370 = vmatpush.msra.mxu0 %v350
    %371 = vmatmul.f32.gmra.mxu0 %v353
    %v372 = vpop.f32.mrf.mxu0
    %v373 = vadd.f32 0.0, %v372
    %374 = vdwg.mxu0
    %375 = vrot.lane.b32.xlu0 %v236, 120
    %v376 = vpop.permute.xlu0 %375
    %377 = vrot.lane.b32.xlu0 %v231, 88
    %v378 = vpop.permute.xlu0 %377
    %v379 = vsel %vm247, %v376, 0
    %v381 = vsel %vm247, %v378, 0
    %383 = vmatpush.xpose.msra.mxu0 0.0
    %384 = vmatpush.xpose.msra.mxu0 0.0
    %385 = vmatpush.xpose.msra.mxu0 0.0
    %386 = vmatpush.xpose.msra.mxu0 0.0
    %387 = vmatpush.xpose.msra.mxu0 0.0
    %388 = vmatpush.xpose.msra.mxu0 0.0
    %389 = vmatpush.xpose.msra.mxu0 0.0
    %390 = vmatpush.xpose.msra.mxu0 0.0
    %391 = vmatpush.xpose.msra.mxu0 0.0
    %392 = vmatpush.xpose.msra.mxu0 0.0
    %393 = vmatpush.xpose.msra.mxu0 0.0
    %394 = vmatpush.xpose.msra.mxu0 0.0
    %395 = vmatpush.xpose.msra.mxu0 0.0
    %396 = vmatpush.xpose.msra.mxu0 0.0
    %397 = vmatpush.xpose.msra.mxu0 0.0
    %398 = vmatpush.xpose.msra.mxu0 %v381
    %399 = vmatmul.f32.gmra.mxu0 %v379
    %v400 = vpop.f32.mrf.mxu0
    %v401 = vadd.f32 %v240, %v400
    %402 = vdwg.mxu0
    %403 = vrot.lane.b32.xlu0 %v237, 120
    %v404 = vpop.permute.xlu0 %403
    %405 = vrot.lane.b32.xlu0 %v234, 88
    %v406 = vpop.permute.xlu0 %405
    %v407 = vsel %vm247, %v404, 0
    %v409 = vsel %vm247, %v406, 0
    %411 = vmatpush.xpose.msra.mxu0 0.0
    %412 = vmatpush.xpose.msra.mxu0 0.0
    %413 = vmatpush.xpose.msra.mxu0 0.0
    %414 = vmatpush.xpose.msra.mxu0 0.0
    %415 = vmatpush.xpose.msra.mxu0 0.0
    %416 = vmatpush.xpose.msra.mxu0 0.0
    %417 = vmatpush.xpose.msra.mxu0 0.0
    %418 = vmatpush.xpose.msra.mxu0 0.0
    %419 = vmatpush.xpose.msra.mxu0 0.0
    %420 = vmatpush.xpose.msra.mxu0 0.0
    %421 = vmatpush.xpose.msra.mxu0 0.0
    %422 = vmatpush.xpose.msra.mxu0 0.0
    %423 = vmatpush.xpose.msra.mxu0 0.0
    %424 = vmatpush.xpose.msra.mxu0 0.0
    %425 = vmatpush.xpose.msra.mxu0 0.0
    %426 = vmatpush.xpose.msra.mxu0 %v409
    %427 = vmatmul.f32.gmra.mxu0 %v407
    %v428 = vpop.f32.mrf.mxu0
    %v429 = vadd.f32 %v241, %v428
    %430 = vdwg.mxu0
    %v431 = vsel %vm247, %v401, -inf
    %432 = vmax.xlane.f32.xlu0 %v431
    %v433 = vpop.xlane.xlu0 %432
    %v434 = vsel %vm247, %v429, -inf
    %435 = vmax.xlane.f32.xlu0 %v434
    %v436 = vpop.xlane.xlu0 %435
    %v437 = vsub.f32 %v401, %v433
    %v438 = vsub.f32 %v429, %v436
    %v439 = vmul.f32 %v437, 1.442695
    %v440 = vpow.pop %v439
    %v441 = vmul.f32 %v438, 1.442695
    %v442 = vpow.pop %v441
    %v443 = vsel %vm247, %v440, 0.0
    %444 = vadd.xlane.f32.xlu0 %v443
    %v445 = vpop.xlane.xlu0 %444
    %v446 = vsel %vm247, %v442, 0.0
    %447 = vadd.xlane.f32.xlu0 %v446
    %v448 = vpop.xlane.xlu0 %447
    %v449 = vrcp.pop %v445
    %v450 = vrcp.pop %v448
    %v451 = vmul.f32 %v440, %v449
    %v452 = vmul.f32 %v442, %v450
    %453 = vrot.lane.b32.xlu0 %v231, 56
    %v454 = vpop.permute.xlu0 %453
    %v457 = vsel %vm247, %v451, 0
    %459 = vmatpush.msra.mxu0 0.0
    %460 = vmatpush.msra.mxu0 0.0
    %461 = vmatpush.msra.mxu0 0.0
    %462 = vmatpush.msra.mxu0 0.0
    %463 = vmatpush.msra.mxu0 0.0
    %464 = vmatpush.msra.mxu0 0.0
    %465 = vmatpush.msra.mxu0 0.0
    %466 = vmatpush.msra.mxu0 0.0
    %467 = vmatpush.msra.mxu0 0.0
    %468 = vmatpush.msra.mxu0 0.0
    %469 = vmatpush.msra.mxu0 0.0
    %470 = vmatpush.msra.mxu0 0.0
    %471 = vmatpush.msra.mxu0 0.0
    %472 = vmatpush.msra.mxu0 0.0
    %473 = vmatpush.msra.mxu0 0.0
    %474 = vmatpush.msra.mxu0 %v454
    %475 = vmatmul.f32.gmra.mxu0 %v457
    %v476 = vpop.f32.mrf.mxu0
    %v477 = vadd.f32 0.0, %v476
    %478 = vdwg.mxu0
    %479 = vrot.lane.b32.xlu0 %v234, 56
    %v480 = vpop.permute.xlu0 %479
    %v483 = vsel %vm247, %v452, 0
    %485 = vmatpush.msra.mxu0 0.0
    %486 = vmatpush.msra.mxu0 0.0
    %487 = vmatpush.msra.mxu0 0.0
    %488 = vmatpush.msra.mxu0 0.0
    %489 = vmatpush.msra.mxu0 0.0
    %490 = vmatpush.msra.mxu0 0.0
    %491 = vmatpush.msra.mxu0 0.0
    %492 = vmatpush.msra.mxu0 0.0
    %493 = vmatpush.msra.mxu0 0.0
    %494 = vmatpush.msra.mxu0 0.0
    %495 = vmatpush.msra.mxu0 0.0
    %496 = vmatpush.msra.mxu0 0.0
    %497 = vmatpush.msra.mxu0 0.0
    %498 = vmatpush.msra.mxu0 0.0
    %499 = vmatpush.msra.mxu0 0.0
    %500 = vmatpush.msra.mxu0 %v480
    %501 = vmatmul.f32.gmra.mxu0 %v483
    %v502 = vpop.f32.mrf.mxu0
    %v503 = vadd.f32 0.0, %v502
    %504 = vdwg.mxu0
    %505 = vrot.lane.b32.xlu0 %v236, 112
    %v506 = vpop.permute.xlu0 %505
    %507 = vrot.lane.b32.xlu0 %v231, 80
    %v508 = vpop.permute.xlu0 %507
    %v509 = vsel %vm247, %v506, 0
    %v511 = vsel %vm247, %v508, 0
    %513 = vmatpush.xpose.msra.mxu0 0.0
    %514 = vmatpush.xpose.msra.mxu0 0.0
    %515 = vmatpush.xpose.msra.mxu0 0.0
    %516 = vmatpush.xpose.msra.mxu0 0.0
    %517 = vmatpush.xpose.msra.mxu0 0.0
    %518 = vmatpush.xpose.msra.mxu0 0.0
    %519 = vmatpush.xpose.msra.mxu0 0.0
    %520 = vmatpush.xpose.msra.mxu0 0.0
    %521 = vmatpush.xpose.msra.mxu0 0.0
    %522 = vmatpush.xpose.msra.mxu0 0.0
    %523 = vmatpush.xpose.msra.mxu0 0.0
    %524 = vmatpush.xpose.msra.mxu0 0.0
    %525 = vmatpush.xpose.msra.mxu0 0.0
    %526 = vmatpush.xpose.msra.mxu0 0.0
    %527 = vmatpush.xpose.msra.mxu0 0.0
    %528 = vmatpush.xpose.msra.mxu0 %v511
    %529 = vmatmul.f32.gmra.mxu0 %v509
    %v530 = vpop.f32.mrf.mxu0
    %v531 = vadd.f32 %v240, %v530
    %532 = vdwg.mxu0
    %533 = vrot.lane.b32.xlu0 %v237, 112
    %v534 = vpop.permute.xlu0 %533
    %535 = vrot.lane.b32.xlu0 %v234, 80
    %v536 = vpop.permute.xlu0 %535
    %v537 = vsel %vm247, %v534, 0
    %v539 = vsel %vm247, %v536, 0
    %541 = vmatpush.xpose.msra.mxu0 0.0
    %542 = vmatpush.xpose.msra.mxu0 0.0
    %543 = vmatpush.xpose.msra.mxu0 0.0
    %544 = vmatpush.xpose.msra.mxu0 0.0
    %545 = vmatpush.xpose.msra.mxu0 0.0
    %546 = vmatpush.xpose.msra.mxu0 0.0
    %547 = vmatpush.xpose.msra.mxu0 0.0
    %548 = vmatpush.xpose.msra.mxu0 0.0
    %549 = vmatpush.xpose.msra.mxu0 0.0
    %550 = vmatpush.xpose.msra.mxu0 0.0
    %551 = vmatpush.xpose.msra.mxu0 0.0
    %552 = vmatpush.xpose.msra.mxu0 0.0
    %553 = vmatpush.xpose.msra.mxu0 0.0
    %554 = vmatpush.xpose.msra.mxu0 0.0
    %555 = vmatpush.xpose.msra.mxu0 0.0
    %556 = vmatpush.xpose.msra.mxu0 %v539
    %557 = vmatmul.f32.gmra.mxu0 %v537
    %v558 = vpop.f32.mrf.mxu0
    %v559 = vadd.f32 %v241, %v558
    %560 = vdwg.mxu0
    %v561 = vsel %vm247, %v531, -inf
    %562 = vmax.xlane.f32.xlu0 %v561
    %v563 = vpop.xlane.xlu0 %562
    %v564 = vsel %vm247, %v559, -inf
    %565 = vmax.xlane.f32.xlu0 %v564
    %v566 = vpop.xlane.xlu0 %565
    %v567 = vsub.f32 %v531, %v563
    %v568 = vsub.f32 %v559, %v566
    %v569 = vmul.f32 %v567, 1.442695
    %v570 = vpow.pop %v569
    %v571 = vmul.f32 %v568, 1.442695
    %v572 = vpow.pop %v571
    %v573 = vsel %vm247, %v570, 0.0
    %574 = vadd.xlane.f32.xlu0 %v573
    %v575 = vpop.xlane.xlu0 %574
    %v576 = vsel %vm247, %v572, 0.0
    %577 = vadd.xlane.f32.xlu0 %v576
    %v578 = vpop.xlane.xlu0 %577
    %v579 = vrcp.pop %v575
    %v580 = vrcp.pop %v578
    %v581 = vmul.f32 %v570, %v579
    %v582 = vmul.f32 %v572, %v580
    %583 = vrot.lane.b32.xlu0 %v231, 48
    %v584 = vpop.permute.xlu0 %583
    %v587 = vsel %vm247, %v581, 0
    %589 = vmatpush.msra.mxu0 0.0
    %590 = vmatpush.msra.mxu0 0.0
    %591 = vmatpush.msra.mxu0 0.0
    %592 = vmatpush.msra.mxu0 0.0
    %593 = vmatpush.msra.mxu0 0.0
    %594 = vmatpush.msra.mxu0 0.0
    %595 = vmatpush.msra.mxu0 0.0
    %596 = vmatpush.msra.mxu0 0.0
    %597 = vmatpush.msra.mxu0 0.0
    %598 = vmatpush.msra.mxu0 0.0
    %599 = vmatpush.msra.mxu0 0.0
    %600 = vmatpush.msra.mxu0 0.0
    %601 = vmatpush.msra.mxu0 0.0
    %602 = vmatpush.msra.mxu0 0.0
    %603 = vmatpush.msra.mxu0 0.0
    %604 = vmatpush.msra.mxu0 %v584
    %605 = vmatmul.f32.gmra.mxu0 %v587
    %v606 = vpop.f32.mrf.mxu0
    %v607 = vadd.f32 0.0, %v606
    %608 = vdwg.mxu0
    %609 = vrot.lane.b32.xlu0 %v234, 48
    %v610 = vpop.permute.xlu0 %609
    %v613 = vsel %vm247, %v582, 0
    %615 = vmatpush.msra.mxu0 0.0
    %616 = vmatpush.msra.mxu0 0.0
    %617 = vmatpush.msra.mxu0 0.0
    %618 = vmatpush.msra.mxu0 0.0
    %619 = vmatpush.msra.mxu0 0.0
    %620 = vmatpush.msra.mxu0 0.0
    %621 = vmatpush.msra.mxu0 0.0
    %622 = vmatpush.msra.mxu0 0.0
    %623 = vmatpush.msra.mxu0 0.0
    %624 = vmatpush.msra.mxu0 0.0
    %625 = vmatpush.msra.mxu0 0.0
    %626 = vmatpush.msra.mxu0 0.0
    %627 = vmatpush.msra.mxu0 0.0
    %628 = vmatpush.msra.mxu0 0.0
    %629 = vmatpush.msra.mxu0 0.0
    %630 = vmatpush.msra.mxu0 %v610
    %631 = vmatmul.f32.gmra.mxu0 %v613
    %v632 = vpop.f32.mrf.mxu0
    %v633 = vadd.f32 0.0, %v632
    %634 = vdwg.mxu0
    %635 = vrot.lane.b32.xlu0 %v236, 104
    %v636 = vpop.permute.xlu0 %635
    %637 = vrot.lane.b32.xlu0 %v231, 72
    %v638 = vpop.permute.xlu0 %637
    %v639 = vsel %vm247, %v636, 0
    %v641 = vsel %vm247, %v638, 0
    %643 = vmatpush.xpose.msra.mxu0 0.0
    %644 = vmatpush.xpose.msra.mxu0 0.0
    %645 = vmatpush.xpose.msra.mxu0 0.0
    %646 = vmatpush.xpose.msra.mxu0 0.0
    %647 = vmatpush.xpose.msra.mxu0 0.0
    %648 = vmatpush.xpose.msra.mxu0 0.0
    %649 = vmatpush.xpose.msra.mxu0 0.0
    %650 = vmatpush.xpose.msra.mxu0 0.0
    %651 = vmatpush.xpose.msra.mxu0 0.0
    %652 = vmatpush.xpose.msra.mxu0 0.0
    %653 = vmatpush.xpose.msra.mxu0 0.0
    %654 = vmatpush.xpose.msra.mxu0 0.0
    %655 = vmatpush.xpose.msra.mxu0 0.0
    %656 = vmatpush.xpose.msra.mxu0 0.0
    %657 = vmatpush.xpose.msra.mxu0 0.0
    %658 = vmatpush.xpose.msra.mxu0 %v641
    %659 = vmatmul.f32.gmra.mxu0 %v639
    %v660 = vpop.f32.mrf.mxu0
    %v661 = vadd.f32 %v240, %v660
    %662 = vdwg.mxu0
    %663 = vrot.lane.b32.xlu0 %v237, 104
    %v664 = vpop.permute.xlu0 %663
    %665 = vrot.lane.b32.xlu0 %v234, 72
    %v666 = vpop.permute.xlu0 %665
    %v667 = vsel %vm247, %v664, 0
    %v669 = vsel %vm247, %v666, 0
    %671 = vmatpush.xpose.msra.mxu0 0.0
    %672 = vmatpush.xpose.msra.mxu0 0.0
    %673 = vmatpush.xpose.msra.mxu0 0.0
    %674 = vmatpush.xpose.msra.mxu0 0.0
    %675 = vmatpush.xpose.msra.mxu0 0.0
    %676 = vmatpush.xpose.msra.mxu0 0.0
    %677 = vmatpush.xpose.msra.mxu0 0.0
    %678 = vmatpush.xpose.msra.mxu0 0.0
    %679 = vmatpush.xpose.msra.mxu0 0.0
    %680 = vmatpush.xpose.msra.mxu0 0.0
    %681 = vmatpush.xpose.msra.mxu0 0.0
    %682 = vmatpush.xpose.msra.mxu0 0.0
    %683 = vmatpush.xpose.msra.mxu0 0.0
    %684 = vmatpush.xpose.msra.mxu0 0.0
    %685 = vmatpush.xpose.msra.mxu0 0.0
    %686 = vmatpush.xpose.msra.mxu0 %v669
    %687 = vmatmul.f32.gmra.mxu0 %v667
    %v688 = vpop.f32.mrf.mxu0
    %v689 = vadd.f32 %v241, %v688
    %690 = vdwg.mxu0
    %v691 = vsel %vm247, %v661, -inf
    %692 = vmax.xlane.f32.xlu0 %v691
    %v693 = vpop.xlane.xlu0 %692
    %v694 = vsel %vm247, %v689, -inf
    %695 = vmax.xlane.f32.xlu0 %v694
    %v696 = vpop.xlane.xlu0 %695
    %v697 = vsub.f32 %v661, %v693
    %v698 = vsub.f32 %v689, %v696
    %v699 = vmul.f32 %v697, 1.442695
    %v700 = vpow.pop %v699
    %v701 = vmul.f32 %v698, 1.442695
    %v702 = vpow.pop %v701
    %v703 = vsel %vm247, %v700, 0.0
    %704 = vadd.xlane.f32.xlu0 %v703
    %v705 = vpop.xlane.xlu0 %704
    %v706 = vsel %vm247, %v702, 0.0
    %707 = vadd.xlane.f32.xlu0 %v706
    %v708 = vpop.xlane.xlu0 %707
    %v709 = vrcp.pop %v705
    %v710 = vrcp.pop %v708
    %v711 = vmul.f32 %v700, %v709
    %v712 = vmul.f32 %v702, %v710
    %713 = vrot.lane.b32.xlu0 %v231, 40
    %v714 = vpop.permute.xlu0 %713
    %v717 = vsel %vm247, %v711, 0
    %719 = vmatpush.msra.mxu0 0.0
    %720 = vmatpush.msra.mxu0 0.0
    %721 = vmatpush.msra.mxu0 0.0
    %722 = vmatpush.msra.mxu0 0.0
    %723 = vmatpush.msra.mxu0 0.0
    %724 = vmatpush.msra.mxu0 0.0
    %725 = vmatpush.msra.mxu0 0.0
    %726 = vmatpush.msra.mxu0 0.0
    %727 = vmatpush.msra.mxu0 0.0
    %728 = vmatpush.msra.mxu0 0.0
    %729 = vmatpush.msra.mxu0 0.0
    %730 = vmatpush.msra.mxu0 0.0
    %731 = vmatpush.msra.mxu0 0.0
    %732 = vmatpush.msra.mxu0 0.0
    %733 = vmatpush.msra.mxu0 0.0
    %734 = vmatpush.msra.mxu0 %v714
    %735 = vmatmul.f32.gmra.mxu0 %v717
    %v736 = vpop.f32.mrf.mxu0
    %v737 = vadd.f32 0.0, %v736
    %738 = vdwg.mxu0
    %739 = vrot.lane.b32.xlu0 %v234, 40
    %v740 = vpop.permute.xlu0 %739
    %v743 = vsel %vm247, %v712, 0
    %745 = vmatpush.msra.mxu0 0.0
    %746 = vmatpush.msra.mxu0 0.0
    %747 = vmatpush.msra.mxu0 0.0
    %748 = vmatpush.msra.mxu0 0.0
    %749 = vmatpush.msra.mxu0 0.0
    %750 = vmatpush.msra.mxu0 0.0
    %751 = vmatpush.msra.mxu0 0.0
    %752 = vmatpush.msra.mxu0 0.0
    %753 = vmatpush.msra.mxu0 0.0
    %754 = vmatpush.msra.mxu0 0.0
    %755 = vmatpush.msra.mxu0 0.0
    %756 = vmatpush.msra.mxu0 0.0
    %757 = vmatpush.msra.mxu0 0.0
    %758 = vmatpush.msra.mxu0 0.0
    %759 = vmatpush.msra.mxu0 0.0
    %760 = vmatpush.msra.mxu0 %v740
    %761 = vmatmul.f32.gmra.mxu0 %v743
    %v762 = vpop.f32.mrf.mxu0
    %v763 = vadd.f32 0.0, %v762
    %764 = vdwg.mxu0
    %767 = vrot.lane.b32.xlu0 %v477, 8
    %v768 = vpop.permute.xlu0 %767
    %769 = vrot.lane.b32.xlu0 %v503, 8
    %v770 = vpop.permute.xlu0 %769
    %775 = vrot.lane.b32.xlu0 %v607, 16
    %v776 = vpop.permute.xlu0 %775
    %777 = vrot.lane.b32.xlu0 %v633, 16
    %v778 = vpop.permute.xlu0 %777
    %783 = vrot.lane.b32.xlu0 %v737, 24
    %v784 = vpop.permute.xlu0 %783
    %785 = vrot.lane.b32.xlu0 %v763, 24
    %v786 = vpop.permute.xlu0 %785
    %v789 = vsel %vm247, %v347, %v768
    %v790 = vsel %vm247, %v373, %v770
    %vm791 = vcmask 130048
    %v792 = vsel %vm791, %v789, %v776
    %v793 = vsel %vm791, %v790, %v778
    %vm794 = vcmask 195584
    %v795 = vsel %vm794, %v792, %v784
    %v796 = vsel %vm794, %v793, %v786
    %v797 = vld [vmem:[%s6] sm:$0xff]
    %v798 = vld [vmem:[%s6 + $0x8] sm:$0xff]
    %v799 = vld [vmem:[%s6 + $0x10] sm:$0xff]
    %v800 = vld [vmem:[%s6 + $0x18] sm:$0xff]
    %v801 = vld [vmem:[#allocation2] sm:$0x1]
    %v803 = vperm.slane %v801, 0
    %v806 = vsel %vm137, %v795, 0
    %v809 = vsel %vm137, %v796, 0
    %811 = vmatpush.msra.mxu0 0.0
    %812 = vmatpush.msra.mxu0 0.0
    %813 = vmatpush.msra.mxu0 0.0
    %814 = vmatpush.msra.mxu0 0.0
    %815 = vmatpush.msra.mxu0 0.0
    %816 = vmatpush.msra.mxu0 0.0
    %817 = vmatpush.msra.mxu0 0.0
    %818 = vmatpush.msra.mxu0 0.0
    %819 = vmatpush.msra.mxu0 0.0
    %820 = vmatpush.msra.mxu0 0.0
    %821 = vmatpush.msra.mxu0 0.0
    %822 = vmatpush.msra.mxu0 0.0
    %823 = vmatpush.msra.mxu0 %v800
    %824 = vmatpush.msra.mxu0 %v799
    %825 = vmatpush.msra.mxu0 %v798
    %826 = vmatpush.msra.mxu0 %v797
    %827 = vmatmul.f32.gmra.mxu0 %v806
    %v828 = vpop.f32.mrf.mxu0
    %v829 = vadd.f32 %v803, %v828
    %830 = vmatmul.f32.gmra.mxu0 %v809
    %v831 = vpop.f32.mrf.mxu0
    %v832 = vadd.f32 %v803, %v831
    %833 = vdwg.mxu0
    %v834 = vadd.f32 %v131, %v829
    %v835 = vadd.f32 %v132, %v832
    %v836 = vld [vmem:[#allocation4] sm:$0x1]
    %v837 = vld [vmem:[#allocation6] sm:$0x1]
    %v838 = vsel %vm137, %v834, 0.0
    %839 = vadd.xlane.f32.xlu0 %v838
    %v840 = vpop.xlane.xlu0 %839
    %v841 = vsel %vm137, %v835, 0.0
    %842 = vadd.xlane.f32.xlu0 %v841
    %v843 = vpop.xlane.xlu0 %842
    %v844 = vmul.f32 %v840, %v150
    %v845 = vmul.f32 %v843, %v150
    %v846 = vsub.f32 %v834, %v844
    %v847 = vsub.f32 %v835, %v845
    %v848 = vmul.f32 %v846, %v846
    %v849 = vmul.f32 %v847, %v847
    %v850 = vsel %vm137, %v848, 0.0
    %851 = vadd.xlane.f32.xlu0 %v850
    %v852 = vpop.xlane.xlu0 %851
    %v853 = vsel %vm137, %v849, 0.0
    %854 = vadd.xlane.f32.xlu0 %v853
    %v855 = vpop.xlane.xlu0 %854
    %v856 = vmul.f32 %v852, %v150
    %v857 = vmul.f32 %v855, %v150
    %v858 = vadd.f32 %v856, 1e-05
    %v859 = vadd.f32 %v857, 1e-05
    %v860 = vrsqrt.pop %v858
    %v861 = vmul.f32 %v860, %v858
    %v862 = vmul.f32 %v861, %v860
    %v863 = vmul.f32 0.5, %v862
    %v864 = vsub.f32 1.5, %v863
    %v865 = vmul.f32 %v860, %v864
    %vm866 = vweird.f32 %v858
    %vm867 = vweird.f32 %v860
    %vm868 = vmor %vm866, %vm867
    %v869 = vsel %vm868, %v860, %v865
    %v870 = vrsqrt.pop %v859
    %v871 = vmul.f32 %v870, %v859
    %v872 = vmul.f32 %v871, %v870
    %v873 = vmul.f32 0.5, %v872
    %v874 = vsub.f32 1.5, %v873
    %v875 = vmul.f32 %v870, %v874
    %vm876 = vweird.f32 %v859
    %vm877 = vweird.f32 %v870
    %vm878 = vmor %vm876, %vm877
    %v879 = vsel %vm878, %v870, %v875
    %v880 = vmul.f32 %v846, %v869
    %v881 = vmul.f32 %v847, %v879
    %v883 = vperm.slane %v836, 0
    %v885 = vmul.f32 %v880, %v883
    %v886 = vmul.f32 %v881, %v883
    %v888 = vperm.slane %v837, 0
    %v890 = vadd.f32 %v885, %v888
    %v891 = vadd.f32 %v886, %v888
    %v892 = vld [vmem:[#allocation7] sm:$0xff]
    %v893 = vld [vmem:[#allocation7 + $0x8] sm:$0xff]
    %v894 = vld [vmem:[#allocation7 + $0x10] sm:$0xff]
    %v895 = vld [vmem:[#allocation7 + $0x18] sm:$0xff]
    %v896 = vld [vmem:[#allocation9] sm:$0x1]
    %v898 = vperm.slane %v896, 0
    %v901 = vsel %vm137, %v890, 0
    %v904 = vsel %vm137, %v891, 0
    %906 = vmatpush.msra.mxu0 0.0
    %907 = vmatpush.msra.mxu0 0.0
    %908 = vmatpush.msra.mxu0 0.0
    %909 = vmatpush.msra.mxu0 0.0
    %910 = vmatpush.msra.mxu0 0.0
    %911 = vmatpush.msra.mxu0 0.0
    %912 = vmatpush.msra.mxu0 0.0
    %913 = vmatpush.msra.mxu0 0.0
    %914 = vmatpush.msra.mxu0 0.0
    %915 = vmatpush.msra.mxu0 0.0
    %916 = vmatpush.msra.mxu0 0.0
    %917 = vmatpush.msra.mxu0 0.0
    %918 = vmatpush.msra.mxu0 %v895
    %919 = vmatpush.msra.mxu0 %v894
    %920 = vmatpush.msra.mxu0 %v893
    %921 = vmatpush.msra.mxu0 %v892
    %922 = vmatmul.f32.gmra.mxu0 %v901
    %v923 = vpop.f32.mrf.mxu0
    %v924 = vadd.f32 %v898, %v923
    %925 = vmatmul.f32.gmra.mxu0 %v904
    %v926 = vpop.f32.mrf.mxu0
    %v927 = vadd.f32 %v898, %v926
    %928 = vdwg.mxu0
    %v929 = vmax.f32 %v924, 0.0
    %v930 = vmax.f32 %v927, 0.0
    %v931 = vld [vmem:[%s12] sm:$0xff]
    %v932 = vld [vmem:[%s12 + $0x8] sm:$0xff]
    %v933 = vld [vmem:[%s12 + $0x10] sm:$0xff]
    %v934 = vld [vmem:[%s12 + $0x18] sm:$0xff]
    %v935 = vld [vmem:[%s12 + $0x20] sm:$0xff]
    %v936 = vld [vmem:[%s12 + $0x28] sm:$0xff]
    %v937 = vld [vmem:[%s12 + $0x30] sm:$0xff]
    %v938 = vld [vmem:[%s12 + $0x38] sm:$0xff]
    %v939 = vld [vmem:[#allocation10] sm:$0x1]
    %v941 = vperm.slane %v939, 0
    %vm943 = vcmask 523264
    %v945 = vsel %vm943, %v929, 0
    %v948 = vsel %vm943, %v930, 0
    %950 = vmatpush.msra.mxu0 0.0
    %951 = vmatpush.msra.mxu0 0.0
    %952 = vmatpush.msra.mxu0 0.0
    %953 = vmatpush.msra.mxu0 0.0
    %954 = vmatpush.msra.mxu0 0.0
    %955 = vmatpush.msra.mxu0 0.0
    %956 = vmatpush.msra.mxu0 0.0
    %957 = vmatpush.msra.mxu0 0.0
    %958 = vmatpush.msra.mxu0 %v938
    %959 = vmatpush.msra.mxu0 %v937
    %960 = vmatpush.msra.mxu0 %v936
    %961 = vmatpush.msra.mxu0 %v935
    %962 = vmatpush.msra.mxu0 %v934
    %963 = vmatpush.msra.mxu0 %v933
    %964 = vmatpush.msra.mxu0 %v932
    %965 = vmatpush.msra.mxu0 %v931
    %966 = vmatmul.f32.gmra.mxu0 %v945
    %v967 = vpop.f32.mrf.mxu0
    %v968 = vadd.f32 %v941, %v967
    %969 = vmatmul.f32.gmra.mxu0 %v948
    %v970 = vpop.f32.mrf.mxu0
    %v971 = vadd.f32 %v941, %v970
    %972 = vdwg.mxu0
    %v973 = vadd.f32 %v834, %v968
    %v974 = vadd.f32 %v835, %v971
    %975 = vst.msk [vmem:[%s14] sm:$0xff] %vm137, %v973
    %976 = vst.msk [vmem:[%s14 + $0x8] sm:$0xff] %vm137, %v974
    // Predicated region
    $region82: #{extraction_preln_transformer.2} parent=1 // pred_check
      _
    $region83: #{extraction_preln_transformer.2} parent=1 // pred_check_branch
      %978 = sbr.rel (0) target = $region85
    $region84: #{extraction_preln_transformer.2} parent=1 // pred_region
      _
    $region85: #{extraction_preln_transformer.2} parent=1 // pred_fallthru
      _
    // Predicated region
    $region86: #{extraction_preln_transformer.2} parent=1 // pred_check
      _
    $region87: #{extraction_preln_transformer.2} parent=1 // pred_check_branch
      %980 = sbr.rel (0) target = $region89
    $region88: #{extraction_preln_transformer.2} parent=1 // pred_region
      _
    $region89: #{extraction_preln_transformer.2} parent=1 // pred_fallthru
      _
    %981 = vsyncpa [#allocation3], 1
    %982 = vsyncpa [#allocation5], 1
    %983 = vsyncpa [#allocation8], 1
    %984 = vsyncpa [#allocation11], 1

// kernel: extraction_preln_transformer.3
$region0: #{extraction_preln_transformer.3}
  #allocation0 [shape = 'u32[]', space=smem, size = 0x4, offset = 0x4, fixed_abs, tag = 'smem constant byte address 0x4 - core index']
  #allocation1 [shape = 'u32[72,128]{1,0:T(1,128)}', space=vmem, size = 0x9000, scoped, tag = 'internal scratch']
  %s0 = inlined_call_operand.vmem [shape: f32[2,8,32], index: 0, kind: input, shape index: {}]
  %s1 = inlined_call_operand.vmem [shape: f32[2,1,8], index: 1, kind: input, shape index: {}]
  %s2 = inlined_call_operand.hbm [shape: f32[1,32], index: 2, kind: input, shape index: {}]
  %s3 = inlined_call_operand.hbm [shape: f32[1,32], index: 3, kind: input, shape index: {}]
  %s4 = inlined_call_operand.vmem [shape: f32[32,96], index: 4, kind: input, shape index: {}]
  %s5 = inlined_call_operand.hbm [shape: f32[1,96], index: 5, kind: input, shape index: {}]
  %s6 = inlined_call_operand.vmem [shape: f32[32,32], index: 6, kind: input, shape index: {}]
  %s7 = inlined_call_operand.hbm [shape: f32[1,32], index: 7, kind: input, shape index: {}]
  %s8 = inlined_call_operand.hbm [shape: f32[1,32], index: 8, kind: input, shape index: {}]
  %s9 = inlined_call_operand.hbm [shape: f32[1,32], index: 9, kind: input, shape index: {}]
  %s10 = inlined_call_operand.vmem [shape: f32[32,64], index: 10, kind: input, shape index: {}]
  %s11 = inlined_call_operand.hbm [shape: f32[1,64], index: 11, kind: input, shape index: {}]
  %s12 = inlined_call_operand.vmem [shape: f32[64,32], index: 12, kind: input, shape index: {}]
  %s13 = inlined_call_operand.hbm [shape: f32[1,32], index: 13, kind: input, shape index: {}]
  %s14 = inlined_call_operand.hbm [shape: f32[2,8,32], index: 14, kind: output, shape index: {}]
  %s15 = sld [smem:[#allocation0]]
  $region98: #{extraction_preln_transformer.3} parent=0
    _
  %s17 = ssub.s32 1, %s15
  %s18 = scalar_select 0, %s17, %s15
  $region1: #{extraction_preln_transformer.3} parent=0
    #allocation2 [shape = 'u8[512]{0}', space=vmem, size = 0x400, scoped, tag = 'input window, operand 2, single buffered']
    #allocation3 [shape = 's32[1]{0}', space=sflag, size = 0x4, scoped, tag = 'scoped memory for extraction_preln_transformer.3']
    #allocation4 [shape = 's32[1]{0}', space=sflag, size = 0x4, scoped, tag = 'scoped memory for extraction_preln_transformer.3']
    #allocation5 [shape = 'u8[512]{0}', space=vmem, size = 0x400, scoped, tag = 'input window, operand 3, single buffered']
    #allocation6 [shape = 's32[1]{0}', space=sflag, size = 0x4, scoped, tag = 'scoped memory for extraction_preln_transformer.3']
    #allocation7 [shape = 'u8[512]{0}', space=vmem, size = 0x400, scoped, tag = 'input window, operand 5, single buffered']
    #allocation8 [shape = 'u8[512]{0}', space=vmem, size = 0x400, scoped, tag = 'input window, operand 7, single buffered']
    #allocation9 [shape = 's32[1]{0}', space=sflag, size = 0x4, scoped, tag = 'scoped memory for extraction_preln_transformer.3']
    #allocation10 [shape = 'u8[512]{0}', space=vmem, size = 0x400, scoped, tag = 'input window, operand 8, single buffered']
    #allocation11 [shape = 'u8[512]{0}', space=vmem, size = 0x400, scoped, tag = 'input window, operand 9, single buffered']
    #allocation12 [shape = 's32[1]{0}', space=sflag, size = 0x4, scoped, tag = 'scoped memory for extraction_preln_transformer.3']
    #allocation13 [shape = 'u8[512]{0}', space=vmem, size = 0x400, scoped, tag = 'input window, operand 11, single buffered']
    #allocation14 [shape = 'u8[512]{0}', space=vmem, size = 0x400, scoped, tag = 'input window, operand 13, single buffered']
    #allocation15 [shape = 's32[1]{0}', space=sflag, size = 0x4, scoped, tag = 'scoped memory for extraction_preln_transformer.3']
    #allocation16 [shape = 'u8[8192]{0}', space=vmem, size = 0x2000, scoped, tag = 'output window, operand 0, single buffered']
    %19 = vsyncpa [#allocation3], 0
    %20 = vsyncpa [#allocation6], 0
    %21 = vsyncpa [#allocation9], 0
    %22 = vsyncpa [#allocation12], 0
    %23 = vsyncpa [#allocation15], 0
    %24 = vsyncpa [#allocation4], 0
    // Predicated region
    $region2: #{extraction_preln_transformer.3} parent=1 // pred_check
      _
    $region3: #{extraction_preln_transformer.3} parent=1 // pred_check_branch
      %26 = sbr.rel (0) target = $region5
    $region4: #{extraction_preln_transformer.3} parent=1 // pred_region
      _
    $region5: #{extraction_preln_transformer.3} parent=1 // pred_fallthru
      _
    // Predicated region
    $region6: #{extraction_preln_transformer.3} parent=1 // pred_check
      _
    $region7: #{extraction_preln_transformer.3} parent=1 // pred_check_branch
      %28 = sbr.rel (0) target = $region9
    $region8: #{extraction_preln_transformer.3} parent=1 // pred_region
      _
    $region9: #{extraction_preln_transformer.3} parent=1 // pred_fallthru
      _
    // Predicated region
    $region10: #{extraction_preln_transformer.3} parent=1 // pred_check
      _
    $region11: #{extraction_preln_transformer.3} parent=1 // pred_check_branch
      %30 = sbr.rel (0) target = $region13
    $region12: #{extraction_preln_transformer.3} parent=1 // pred_region
      %32 = vsyncadd [#allocation3], 0
      %s34 = sshll.u32 %s2, 4
      %s35 = int_to_ptr.hbm [resolvable:$true] %s34
      %s36 = sshll.u32 [#allocation2], 4
      %s37 = int_to_ptr.vmem [resolvable:$true] %s36
      %39 = dma.hbm_to_vmem [thread:$0]  %s35, 16, %s37, [#allocation3]
    $region13: #{extraction_preln_transformer.3} parent=1 // pred_fallthru
      _
    // Predicated region
    $region14: #{extraction_preln_transformer.3} parent=1 // pred_check
      _
    $region15: #{extraction_preln_transformer.3} parent=1 // pred_check_branch
      %41 = sbr.rel (0) target = $region17
    $region16: #{extraction_preln_transformer.3} parent=1 // pred_region
      %43 = vsyncadd [#allocation6], 0
      %s45 = sshll.u32 %s3, 4
      %s46 = int_to_ptr.hbm [resolvable:$true] %s45
      %s47 = sshll.u32 [#allocation5], 4
      %s48 = int_to_ptr.vmem [resolvable:$true] %s47
      %50 = dma.hbm_to_vmem [thread:$0]  %s46, 16, %s48, [#allocation6]
    $region17: #{extraction_preln_transformer.3} parent=1 // pred_fallthru
      _
    // Predicated region
    $region18: #{extraction_preln_transformer.3} parent=1 // pred_check
      _
    $region19: #{extraction_preln_transformer.3} parent=1 // pred_check_branch
      %52 = sbr.rel (0) target = $region21
    $region20: #{extraction_preln_transformer.3} parent=1 // pred_region
      _
    $region21: #{extraction_preln_transformer.3} parent=1 // pred_fallthru
      _
    // Predicated region
    $region22: #{extraction_preln_transformer.3} parent=1 // pred_check
      _
    $region23: #{extraction_preln_transformer.3} parent=1 // pred_check_branch
      %54 = sbr.rel (0) target = $region25
    $region24: #{extraction_preln_transformer.3} parent=1 // pred_region
      %56 = vsyncadd [#allocation6], 0
      %s58 = sshll.u32 %s5, 4
      %s59 = int_to_ptr.hbm [resolvable:$true] %s58
      %s60 = sshll.u32 [#allocation7], 4
      %s61 = int_to_ptr.vmem [resolvable:$true] %s60
      %63 = dma.hbm_to_vmem [thread:$0]  %s59, 16, %s61, [#allocation6]
    $region25: #{extraction_preln_transformer.3} parent=1 // pred_fallthru
      _
    // Predicated region
    $region26: #{extraction_preln_transformer.3} parent=1 // pred_check
      _
    $region27: #{extraction_preln_transformer.3} parent=1 // pred_check_branch
      %65 = sbr.rel (0) target = $region29
    $region28: #{extraction_preln_transformer.3} parent=1 // pred_region
      _
    $region29: #{extraction_preln_transformer.3} parent=1 // pred_fallthru
      _
    // Predicated region
    $region30: #{extraction_preln_transformer.3} parent=1 // pred_check
      _
    $region31: #{extraction_preln_transformer.3} parent=1 // pred_check_branch
      %67 = sbr.rel (0) target = $region33
    $region32: #{extraction_preln_transformer.3} parent=1 // pred_region
      %69 = vsyncadd [#allocation9], 0
      %s71 = sshll.u32 %s7, 4
      %s72 = int_to_ptr.hbm [resolvable:$true] %s71
      %s73 = sshll.u32 [#allocation8], 4
      %s74 = int_to_ptr.vmem [resolvable:$true] %s73
      %76 = dma.hbm_to_vmem [thread:$0]  %s72, 16, %s74, [#allocation9]
    $region33: #{extraction_preln_transformer.3} parent=1 // pred_fallthru
      _
    // Predicated region
    $region34: #{extraction_preln_transformer.3} parent=1 // pred_check
      _
    $region35: #{extraction_preln_transformer.3} parent=1 // pred_check_branch
      %78 = sbr.rel (0) target = $region37
    $region36: #{extraction_preln_transformer.3} parent=1 // pred_region
      %80 = vsyncadd [#allocation9], 0
      %s82 = sshll.u32 %s8, 4
      %s83 = int_to_ptr.hbm [resolvable:$true] %s82
      %s84 = sshll.u32 [#allocation10], 4
      %s85 = int_to_ptr.vmem [resolvable:$true] %s84
      %87 = dma.hbm_to_vmem [thread:$0]  %s83, 16, %s85, [#allocation9]
    $region37: #{extraction_preln_transformer.3} parent=1 // pred_fallthru
      _
    // Predicated region
    $region38: #{extraction_preln_transformer.3} parent=1 // pred_check
      _
    $region39: #{extraction_preln_transformer.3} parent=1 // pred_check_branch
      %89 = sbr.rel (0) target = $region41
    $region40: #{extraction_preln_transformer.3} parent=1 // pred_region
      %91 = vsyncadd [#allocation12], 0
      %s93 = sshll.u32 %s9, 4
      %s94 = int_to_ptr.hbm [resolvable:$true] %s93
      %s95 = sshll.u32 [#allocation11], 4
      %s96 = int_to_ptr.vmem [resolvable:$true] %s95
      %98 = dma.hbm_to_vmem [thread:$0]  %s94, 16, %s96, [#allocation12]
    $region41: #{extraction_preln_transformer.3} parent=1 // pred_fallthru
      _
    // Predicated region
    $region42: #{extraction_preln_transformer.3} parent=1 // pred_check
      _
    $region43: #{extraction_preln_transformer.3} parent=1 // pred_check_branch
      %100 = sbr.rel (0) target = $region45
    $region44: #{extraction_preln_transformer.3} parent=1 // pred_region
      _
    $region45: #{extraction_preln_transformer.3} parent=1 // pred_fallthru
      _
    // Predicated region
    $region46: #{extraction_preln_transformer.3} parent=1 // pred_check
      _
    $region47: #{extraction_preln_transformer.3} parent=1 // pred_check_branch
      %102 = sbr.rel (0) target = $region49
    $region48: #{extraction_preln_transformer.3} parent=1 // pred_region
      %104 = vsyncadd [#allocation12], 0
      %s106 = sshll.u32 %s11, 4
      %s107 = int_to_ptr.hbm [resolvable:$true] %s106
      %s108 = sshll.u32 [#allocation13], 4
      %s109 = int_to_ptr.vmem [resolvable:$true] %s108
      %111 = dma.hbm_to_vmem [thread:$0]  %s107, 16, %s109, [#allocation12]
    $region49: #{extraction_preln_transformer.3} parent=1 // pred_fallthru
      _
    // Predicated region
    $region50: #{extraction_preln_transformer.3} parent=1 // pred_check
      _
    $region51: #{extraction_preln_transformer.3} parent=1 // pred_check_branch
      %113 = sbr.rel (0) target = $region53
    $region52: #{extraction_preln_transformer.3} parent=1 // pred_region
      _
    $region53: #{extraction_preln_transformer.3} parent=1 // pred_fallthru
      _
    // Predicated region
    $region54: #{extraction_preln_transformer.3} parent=1 // pred_check
      _
    $region55: #{extraction_preln_transformer.3} parent=1 // pred_check_branch
      %115 = sbr.rel (0) target = $region57
    $region56: #{extraction_preln_transformer.3} parent=1 // pred_region
      %117 = vsyncadd [#allocation15], 0
      %s119 = sshll.u32 %s13, 4
      %s120 = int_to_ptr.hbm [resolvable:$true] %s119
      %s121 = sshll.u32 [#allocation14], 4
      %s122 = int_to_ptr.vmem [resolvable:$true] %s121
      %124 = dma.hbm_to_vmem [thread:$0]  %s120, 16, %s122, [#allocation15]
    $region57: #{extraction_preln_transformer.3} parent=1 // pred_fallthru
      _
    // Predicated region
    $region58: #{extraction_preln_transformer.3} parent=1 // pred_check
      _
    $region59: #{extraction_preln_transformer.3} parent=1 // pred_check_branch
      %126 = sbr.rel (0) target = $region61
    $region60: #{extraction_preln_transformer.3} parent=1 // pred_region
      %128 = dma.done [#allocation3], 16
    $region61: #{extraction_preln_transformer.3} parent=1 // pred_fallthru
      _
    // Predicated region
    $region62: #{extraction_preln_transformer.3} parent=1 // pred_check
      _
    $region63: #{extraction_preln_transformer.3} parent=1 // pred_check_branch
      %130 = sbr.rel (0) target = $region65
    $region64: #{extraction_preln_transformer.3} parent=1 // pred_region
      %132 = dma.done [#allocation6], 16
    $region65: #{extraction_preln_transformer.3} parent=1 // pred_fallthru
      _
    // Predicated region
    $region66: #{extraction_preln_transformer.3} parent=1 // pred_check
      _
    $region67: #{extraction_preln_transformer.3} parent=1 // pred_check_branch
      %134 = sbr.rel (0) target = $region69
    $region68: #{extraction_preln_transformer.3} parent=1 // pred_region
      %136 = dma.done [#allocation6], 16
    $region69: #{extraction_preln_transformer.3} parent=1 // pred_fallthru
      _
    // Predicated region
    $region70: #{extraction_preln_transformer.3} parent=1 // pred_check
      _
    $region71: #{extraction_preln_transformer.3} parent=1 // pred_check_branch
      %138 = sbr.rel (0) target = $region73
    $region72: #{extraction_preln_transformer.3} parent=1 // pred_region
      %140 = dma.done [#allocation9], 16
    $region73: #{extraction_preln_transformer.3} parent=1 // pred_fallthru
      _
    // Predicated region
    $region74: #{extraction_preln_transformer.3} parent=1 // pred_check
      _
    $region75: #{extraction_preln_transformer.3} parent=1 // pred_check_branch
      %142 = sbr.rel (0) target = $region77
    $region76: #{extraction_preln_transformer.3} parent=1 // pred_region
      %144 = dma.done [#allocation9], 16
    $region77: #{extraction_preln_transformer.3} parent=1 // pred_fallthru
      _
    // Predicated region
    $region78: #{extraction_preln_transformer.3} parent=1 // pred_check
      _
    $region79: #{extraction_preln_transformer.3} parent=1 // pred_check_branch
      %146 = sbr.rel (0) target = $region81
    $region80: #{extraction_preln_transformer.3} parent=1 // pred_region
      %148 = dma.done [#allocation12], 16
    $region81: #{extraction_preln_transformer.3} parent=1 // pred_fallthru
      _
    // Predicated region
    $region82: #{extraction_preln_transformer.3} parent=1 // pred_check
      _
    $region83: #{extraction_preln_transformer.3} parent=1 // pred_check_branch
      %150 = sbr.rel (0) target = $region85
    $region84: #{extraction_preln_transformer.3} parent=1 // pred_region
      %152 = dma.done [#allocation12], 16
    $region85: #{extraction_preln_transformer.3} parent=1 // pred_fallthru
      _
    // Predicated region
    $region86: #{extraction_preln_transformer.3} parent=1 // pred_check
      _
    $region87: #{extraction_preln_transformer.3} parent=1 // pred_check_branch
      %154 = sbr.rel (0) target = $region89
    $region88: #{extraction_preln_transformer.3} parent=1 // pred_region
      %156 = dma.done [#allocation15], 16
    $region89: #{extraction_preln_transformer.3} parent=1 // pred_fallthru
      _
    %v157 = vld [vmem:[%s0] sm:$0xff]
    %v158 = vld [vmem:[%s0 + $0x8] sm:$0xff]
    %v159 = vld [vmem:[%s1] sm:$0x1]
    %v160 = vld [vmem:[%s1 + $0x1] sm:$0x1]
    %v161 = vld [vmem:[#allocation2] sm:$0x1]
    %v162 = vld [vmem:[#allocation5] sm:$0x1]
    %vm163 = vcmask 261120
    %v164 = vsel %vm163, %v157, 0.0
    %165 = vadd.xlane.f32.xlu0 %v164
    %v166 = vpop.xlane.xlu0 %165
    %v167 = vsel %vm163, %v158, 0.0
    %168 = vadd.xlane.f32.xlu0 %v167
    %v169 = vpop.xlane.xlu0 %168
    %v170 = vrcp.pop 32.0
    %v171 = vmul.f32 32.0, %v170
    %v172 = vsub.f32 1.0, %v171
    %v173 = vmul.f32 %v170, %v172
    %v174 = vadd.f32 %v170, %v173
    %vm175 = vweird.f32 %v170
    %v176 = vsel %vm175, %v170, %v174
    %v177 = vmul.f32 %v166, %v176
    %v178 = vmul.f32 %v169, %v176
    %v179 = vsub.f32 %v157, %v177
    %v180 = vsub.f32 %v158, %v178
    %v181 = vmul.f32 %v179, %v179
    %v182 = vmul.f32 %v180, %v180
    %v183 = vsel %vm163, %v181, 0.0
    %184 = vadd.xlane.f32.xlu0 %v183
    %v185 = vpop.xlane.xlu0 %184
    %v186 = vsel %vm163, %v182, 0.0
    %187 = vadd.xlane.f32.xlu0 %v186
    %v188 = vpop.xlane.xlu0 %187
    %v189 = vmul.f32 %v185, %v176
    %v190 = vmul.f32 %v188, %v176
    %v191 = vadd.f32 %v189, 1e-05
    %v192 = vadd.f32 %v190, 1e-05
    %v193 = vrsqrt.pop %v191
    %v194 = vmul.f32 %v193, %v191
    %v195 = vmul.f32 %v194, %v193
    %v196 = vmul.f32 0.5, %v195
    %v197 = vsub.f32 1.5, %v196
    %v198 = vmul.f32 %v193, %v197
    %vm199 = vweird.f32 %v191
    %vm200 = vweird.f32 %v193
    %vm201 = vmor %vm199, %vm200
    %v202 = vsel %vm201, %v193, %v198
    %v203 = vrsqrt.pop %v192
    %v204 = vmul.f32 %v203, %v192
    %v205 = vmul.f32 %v204, %v203
    %v206 = vmul.f32 0.5, %v205
    %v207 = vsub.f32 1.5, %v206
    %v208 = vmul.f32 %v203, %v207
    %vm209 = vweird.f32 %v192
    %vm210 = vweird.f32 %v203
    %vm211 = vmor %vm209, %vm210
    %v212 = vsel %vm211, %v203, %v208
    %v213 = vmul.f32 %v179, %v202
    %v214 = vmul.f32 %v180, %v212
    %v216 = vperm.slane %v161, 0
    %v218 = vmul.f32 %v213, %v216
    %v219 = vmul.f32 %v214, %v216
    %v221 = vperm.slane %v162, 0
    %v223 = vadd.f32 %v218, %v221
    %v224 = vadd.f32 %v219, %v221
    %v225 = vld [vmem:[%s4] sm:$0xff]
    %v226 = vld [vmem:[%s4 + $0x8] sm:$0xff]
    %v227 = vld [vmem:[%s4 + $0x10] sm:$0xff]
    %v228 = vld [vmem:[%s4 + $0x18] sm:$0xff]
    %v229 = vld [vmem:[#allocation7] sm:$0x1]
    %v231 = vperm.slane %v229, 0
    %v234 = vsel %vm163, %v223, 0
    %v237 = vsel %vm163, %v224, 0
    %239 = vmatpush.msra.mxu0 0.0
    %240 = vmatpush.msra.mxu0 0.0
    %241 = vmatpush.msra.mxu0 0.0
    %242 = vmatpush.msra.mxu0 0.0
    %243 = vmatpush.msra.mxu0 0.0
    %244 = vmatpush.msra.mxu0 0.0
    %245 = vmatpush.msra.mxu0 0.0
    %246 = vmatpush.msra.mxu0 0.0
    %247 = vmatpush.msra.mxu0 0.0
    %248 = vmatpush.msra.mxu0 0.0
    %249 = vmatpush.msra.mxu0 0.0
    %250 = vmatpush.msra.mxu0 0.0
    %251 = vmatpush.msra.mxu0 %v228
    %252 = vmatpush.msra.mxu0 %v227
    %253 = vmatpush.msra.mxu0 %v226
    %254 = vmatpush.msra.mxu0 %v225
    %255 = vmatmul.f32.gmra.mxu0 %v234
    %v256 = vpop.f32.mrf.mxu0
    %v257 = vadd.f32 %v231, %v256
    %258 = vmatmul.f32.gmra.mxu0 %v237
    %v259 = vpop.f32.mrf.mxu0
    %v260 = vadd.f32 %v231, %v259
    %261 = vdwg.mxu0
    %v262 = vmul.f32 %v257, 0.35355338
    %v263 = vmul.f32 %v260, 0.35355338
    %v266 = vperm.slane %v159, 0
    %v267 = vperm.slane %v160, 0
    %271 = vrot.lane.b32.xlu0 %v257, 96
    %v272 = vpop.permute.xlu0 %271
    %vm273 = vcmask 64512
    %v275 = vsel %vm273, %v262, 0
    %v277 = vsel %vm273, %v272, 0
    %279 = vmatpush.xpose.msra.mxu0 0.0
    %280 = vmatpush.xpose.msra.mxu0 0.0
    %281 = vmatpush.xpose.msra.mxu0 0.0
    %282 = vmatpush.xpose.msra.mxu0 0.0
    %283 = vmatpush.xpose.msra.mxu0 0.0
    %284 = vmatpush.xpose.msra.mxu0 0.0
    %285 = vmatpush.xpose.msra.mxu0 0.0
    %286 = vmatpush.xpose.msra.mxu0 0.0
    %287 = vmatpush.xpose.msra.mxu0 0.0
    %288 = vmatpush.xpose.msra.mxu0 0.0
    %289 = vmatpush.xpose.msra.mxu0 0.0
    %290 = vmatpush.xpose.msra.mxu0 0.0
    %291 = vmatpush.xpose.msra.mxu0 0.0
    %292 = vmatpush.xpose.msra.mxu0 0.0
    %293 = vmatpush.xpose.msra.mxu0 0.0
    %294 = vmatpush.xpose.msra.mxu0 %v277
    %295 = vmatmul.f32.gmra.mxu0 %v275
    %v296 = vpop.f32.mrf.mxu0
    %v297 = vadd.f32 %v266, %v296
    %298 = vdwg.mxu0
    %300 = vrot.lane.b32.xlu0 %v260, 96
    %v301 = vpop.permute.xlu0 %300
    %v303 = vsel %vm273, %v263, 0
    %v305 = vsel %vm273, %v301, 0
    %307 = vmatpush.xpose.msra.mxu0 0.0
    %308 = vmatpush.xpose.msra.mxu0 0.0
    %309 = vmatpush.xpose.msra.mxu0 0.0
    %310 = vmatpush.xpose.msra.mxu0 0.0
    %311 = vmatpush.xpose.msra.mxu0 0.0
    %312 = vmatpush.xpose.msra.mxu0 0.0
    %313 = vmatpush.xpose.msra.mxu0 0.0
    %314 = vmatpush.xpose.msra.mxu0 0.0
    %315 = vmatpush.xpose.msra.mxu0 0.0
    %316 = vmatpush.xpose.msra.mxu0 0.0
    %317 = vmatpush.xpose.msra.mxu0 0.0
    %318 = vmatpush.xpose.msra.mxu0 0.0
    %319 = vmatpush.xpose.msra.mxu0 0.0
    %320 = vmatpush.xpose.msra.mxu0 0.0
    %321 = vmatpush.xpose.msra.mxu0 0.0
    %322 = vmatpush.xpose.msra.mxu0 %v305
    %323 = vmatmul.f32.gmra.mxu0 %v303
    %v324 = vpop.f32.mrf.mxu0
    %v325 = vadd.f32 %v267, %v324
    %326 = vdwg.mxu0
    %v327 = vsel %vm273, %v297, -inf
    %328 = vmax.xlane.f32.xlu0 %v327
    %v329 = vpop.xlane.xlu0 %328
    %v330 = vsel %vm273, %v325, -inf
    %331 = vmax.xlane.f32.xlu0 %v330
    %v332 = vpop.xlane.xlu0 %331
    %v333 = vsub.f32 %v297, %v329
    %v334 = vsub.f32 %v325, %v332
    %v335 = vmul.f32 %v333, 1.442695
    %v336 = vpow.pop %v335
    %v337 = vmul.f32 %v334, 1.442695
    %v338 = vpow.pop %v337
    %v339 = vsel %vm273, %v336, 0.0
    %340 = vadd.xlane.f32.xlu0 %v339
    %v341 = vpop.xlane.xlu0 %340
    %v342 = vsel %vm273, %v338, 0.0
    %343 = vadd.xlane.f32.xlu0 %v342
    %v344 = vpop.xlane.xlu0 %343
    %v345 = vrcp.pop %v341
    %v346 = vrcp.pop %v344
    %v347 = vmul.f32 %v336, %v345
    %v348 = vmul.f32 %v338, %v346
    %349 = vrot.lane.b32.xlu0 %v257, 64
    %v350 = vpop.permute.xlu0 %349
    %v353 = vsel %vm273, %v347, 0
    %355 = vmatpush.msra.mxu0 0.0
    %356 = vmatpush.msra.mxu0 0.0
    %357 = vmatpush.msra.mxu0 0.0
    %358 = vmatpush.msra.mxu0 0.0
    %359 = vmatpush.msra.mxu0 0.0
    %360 = vmatpush.msra.mxu0 0.0
    %361 = vmatpush.msra.mxu0 0.0
    %362 = vmatpush.msra.mxu0 0.0
    %363 = vmatpush.msra.mxu0 0.0
    %364 = vmatpush.msra.mxu0 0.0
    %365 = vmatpush.msra.mxu0 0.0
    %366 = vmatpush.msra.mxu0 0.0
    %367 = vmatpush.msra.mxu0 0.0
    %368 = vmatpush.msra.mxu0 0.0
    %369 = vmatpush.msra.mxu0 0.0
    %370 = vmatpush.msra.mxu0 %v350
    %371 = vmatmul.f32.gmra.mxu0 %v353
    %v372 = vpop.f32.mrf.mxu0
    %v373 = vadd.f32 0.0, %v372
    %374 = vdwg.mxu0
    %375 = vrot.lane.b32.xlu0 %v260, 64
    %v376 = vpop.permute.xlu0 %375
    %v379 = vsel %vm273, %v348, 0
    %381 = vmatpush.msra.mxu0 0.0
    %382 = vmatpush.msra.mxu0 0.0
    %383 = vmatpush.msra.mxu0 0.0
    %384 = vmatpush.msra.mxu0 0.0
    %385 = vmatpush.msra.mxu0 0.0
    %386 = vmatpush.msra.mxu0 0.0
    %387 = vmatpush.msra.mxu0 0.0
    %388 = vmatpush.msra.mxu0 0.0
    %389 = vmatpush.msra.mxu0 0.0
    %390 = vmatpush.msra.mxu0 0.0
    %391 = vmatpush.msra.mxu0 0.0
    %392 = vmatpush.msra.mxu0 0.0
    %393 = vmatpush.msra.mxu0 0.0
    %394 = vmatpush.msra.mxu0 0.0
    %395 = vmatpush.msra.mxu0 0.0
    %396 = vmatpush.msra.mxu0 %v376
    %397 = vmatmul.f32.gmra.mxu0 %v379
    %v398 = vpop.f32.mrf.mxu0
    %v399 = vadd.f32 0.0, %v398
    %400 = vdwg.mxu0
    %401 = vrot.lane.b32.xlu0 %v262, 120
    %v402 = vpop.permute.xlu0 %401
    %403 = vrot.lane.b32.xlu0 %v257, 88
    %v404 = vpop.permute.xlu0 %403
    %v405 = vsel %vm273, %v402, 0
    %v407 = vsel %vm273, %v404, 0
    %409 = vmatpush.xpose.msra.mxu0 0.0
    %410 = vmatpush.xpose.msra.mxu0 0.0
    %411 = vmatpush.xpose.msra.mxu0 0.0
    %412 = vmatpush.xpose.msra.mxu0 0.0
    %413 = vmatpush.xpose.msra.mxu0 0.0
    %414 = vmatpush.xpose.msra.mxu0 0.0
    %415 = vmatpush.xpose.msra.mxu0 0.0
    %416 = vmatpush.xpose.msra.mxu0 0.0
    %417 = vmatpush.xpose.msra.mxu0 0.0
    %418 = vmatpush.xpose.msra.mxu0 0.0
    %419 = vmatpush.xpose.msra.mxu0 0.0
    %420 = vmatpush.xpose.msra.mxu0 0.0
    %421 = vmatpush.xpose.msra.mxu0 0.0
    %422 = vmatpush.xpose.msra.mxu0 0.0
    %423 = vmatpush.xpose.msra.mxu0 0.0
    %424 = vmatpush.xpose.msra.mxu0 %v407
    %425 = vmatmul.f32.gmra.mxu0 %v405
    %v426 = vpop.f32.mrf.mxu0
    %v427 = vadd.f32 %v266, %v426
    %428 = vdwg.mxu0
    %429 = vrot.lane.b32.xlu0 %v263, 120
    %v430 = vpop.permute.xlu0 %429
    %431 = vrot.lane.b32.xlu0 %v260, 88
    %v432 = vpop.permute.xlu0 %431
    %v433 = vsel %vm273, %v430, 0
    %v435 = vsel %vm273, %v432, 0
    %437 = vmatpush.xpose.msra.mxu0 0.0
    %438 = vmatpush.xpose.msra.mxu0 0.0
    %439 = vmatpush.xpose.msra.mxu0 0.0
    %440 = vmatpush.xpose.msra.mxu0 0.0
    %441 = vmatpush.xpose.msra.mxu0 0.0
    %442 = vmatpush.xpose.msra.mxu0 0.0
    %443 = vmatpush.xpose.msra.mxu0 0.0
    %444 = vmatpush.xpose.msra.mxu0 0.0
    %445 = vmatpush.xpose.msra.mxu0 0.0
    %446 = vmatpush.xpose.msra.mxu0 0.0
    %447 = vmatpush.xpose.msra.mxu0 0.0
    %448 = vmatpush.xpose.msra.mxu0 0.0
    %449 = vmatpush.xpose.msra.mxu0 0.0
    %450 = vmatpush.xpose.msra.mxu0 0.0
    %451 = vmatpush.xpose.msra.mxu0 0.0
    %452 = vmatpush.xpose.msra.mxu0 %v435
    %453 = vmatmul.f32.gmra.mxu0 %v433
    %v454 = vpop.f32.mrf.mxu0
    %v455 = vadd.f32 %v267, %v454
    %456 = vdwg.mxu0
    %v457 = vsel %vm273, %v427, -inf
    %458 = vmax.xlane.f32.xlu0 %v457
    %v459 = vpop.xlane.xlu0 %458
    %v460 = vsel %vm273, %v455, -inf
    %461 = vmax.xlane.f32.xlu0 %v460
    %v462 = vpop.xlane.xlu0 %461
    %v463 = vsub.f32 %v427, %v459
    %v464 = vsub.f32 %v455, %v462
    %v465 = vmul.f32 %v463, 1.442695
    %v466 = vpow.pop %v465
    %v467 = vmul.f32 %v464, 1.442695
    %v468 = vpow.pop %v467
    %v469 = vsel %vm273, %v466, 0.0
    %470 = vadd.xlane.f32.xlu0 %v469
    %v471 = vpop.xlane.xlu0 %470
    %v472 = vsel %vm273, %v468, 0.0
    %473 = vadd.xlane.f32.xlu0 %v472
    %v474 = vpop.xlane.xlu0 %473
    %v475 = vrcp.pop %v471
    %v476 = vrcp.pop %v474
    %v477 = vmul.f32 %v466, %v475
    %v478 = vmul.f32 %v468, %v476
    %479 = vrot.lane.b32.xlu0 %v257, 56
    %v480 = vpop.permute.xlu0 %479
    %v483 = vsel %vm273, %v477, 0
    %485 = vmatpush.msra.mxu0 0.0
    %486 = vmatpush.msra.mxu0 0.0
    %487 = vmatpush.msra.mxu0 0.0
    %488 = vmatpush.msra.mxu0 0.0
    %489 = vmatpush.msra.mxu0 0.0
    %490 = vmatpush.msra.mxu0 0.0
    %491 = vmatpush.msra.mxu0 0.0
    %492 = vmatpush.msra.mxu0 0.0
    %493 = vmatpush.msra.mxu0 0.0
    %494 = vmatpush.msra.mxu0 0.0
    %495 = vmatpush.msra.mxu0 0.0
    %496 = vmatpush.msra.mxu0 0.0
    %497 = vmatpush.msra.mxu0 0.0
    %498 = vmatpush.msra.mxu0 0.0
    %499 = vmatpush.msra.mxu0 0.0
    %500 = vmatpush.msra.mxu0 %v480
    %501 = vmatmul.f32.gmra.mxu0 %v483
    %v502 = vpop.f32.mrf.mxu0
    %v503 = vadd.f32 0.0, %v502
    %504 = vdwg.mxu0
    %505 = vrot.lane.b32.xlu0 %v260, 56
    %v506 = vpop.permute.xlu0 %505
    %v509 = vsel %vm273, %v478, 0
    %511 = vmatpush.msra.mxu0 0.0
    %512 = vmatpush.msra.mxu0 0.0
    %513 = vmatpush.msra.mxu0 0.0
    %514 = vmatpush.msra.mxu0 0.0
    %515 = vmatpush.msra.mxu0 0.0
    %516 = vmatpush.msra.mxu0 0.0
    %517 = vmatpush.msra.mxu0 0.0
    %518 = vmatpush.msra.mxu0 0.0
    %519 = vmatpush.msra.mxu0 0.0
    %520 = vmatpush.msra.mxu0 0.0
    %521 = vmatpush.msra.mxu0 0.0
    %522 = vmatpush.msra.mxu0 0.0
    %523 = vmatpush.msra.mxu0 0.0
    %524 = vmatpush.msra.mxu0 0.0
    %525 = vmatpush.msra.mxu0 0.0
    %526 = vmatpush.msra.mxu0 %v506
    %527 = vmatmul.f32.gmra.mxu0 %v509
    %v528 = vpop.f32.mrf.mxu0
    %v529 = vadd.f32 0.0, %v528
    %530 = vdwg.mxu0
    %531 = vrot.lane.b32.xlu0 %v262, 112
    %v532 = vpop.permute.xlu0 %531
    %533 = vrot.lane.b32.xlu0 %v257, 80
    %v534 = vpop.permute.xlu0 %533
    %v535 = vsel %vm273, %v532, 0
    %v537 = vsel %vm273, %v534, 0
    %539 = vmatpush.xpose.msra.mxu0 0.0
    %540 = vmatpush.xpose.msra.mxu0 0.0
    %541 = vmatpush.xpose.msra.mxu0 0.0
    %542 = vmatpush.xpose.msra.mxu0 0.0
    %543 = vmatpush.xpose.msra.mxu0 0.0
    %544 = vmatpush.xpose.msra.mxu0 0.0
    %545 = vmatpush.xpose.msra.mxu0 0.0
    %546 = vmatpush.xpose.msra.mxu0 0.0
    %547 = vmatpush.xpose.msra.mxu0 0.0
    %548 = vmatpush.xpose.msra.mxu0 0.0
    %549 = vmatpush.xpose.msra.mxu0 0.0
    %550 = vmatpush.xpose.msra.mxu0 0.0
    %551 = vmatpush.xpose.msra.mxu0 0.0
    %552 = vmatpush.xpose.msra.mxu0 0.0
    %553 = vmatpush.xpose.msra.mxu0 0.0
    %554 = vmatpush.xpose.msra.mxu0 %v537
    %555 = vmatmul.f32.gmra.mxu0 %v535
    %v556 = vpop.f32.mrf.mxu0
    %v557 = vadd.f32 %v266, %v556
    %558 = vdwg.mxu0
    %559 = vrot.lane.b32.xlu0 %v263, 112
    %v560 = vpop.permute.xlu0 %559
    %561 = vrot.lane.b32.xlu0 %v260, 80
    %v562 = vpop.permute.xlu0 %561
    %v563 = vsel %vm273, %v560, 0
    %v565 = vsel %vm273, %v562, 0
    %567 = vmatpush.xpose.msra.mxu0 0.0
    %568 = vmatpush.xpose.msra.mxu0 0.0
    %569 = vmatpush.xpose.msra.mxu0 0.0
    %570 = vmatpush.xpose.msra.mxu0 0.0
    %571 = vmatpush.xpose.msra.mxu0 0.0
    %572 = vmatpush.xpose.msra.mxu0 0.0
    %573 = vmatpush.xpose.msra.mxu0 0.0
    %574 = vmatpush.xpose.msra.mxu0 0.0
    %575 = vmatpush.xpose.msra.mxu0 0.0
    %576 = vmatpush.xpose.msra.mxu0 0.0
    %577 = vmatpush.xpose.msra.mxu0 0.0
    %578 = vmatpush.xpose.msra.mxu0 0.0
    %579 = vmatpush.xpose.msra.mxu0 0.0
    %580 = vmatpush.xpose.msra.mxu0 0.0
    %581 = vmatpush.xpose.msra.mxu0 0.0
    %582 = vmatpush.xpose.msra.mxu0 %v565
    %583 = vmatmul.f32.gmra.mxu0 %v563
    %v584 = vpop.f32.mrf.mxu0
    %v585 = vadd.f32 %v267, %v584
    %586 = vdwg.mxu0
    %v587 = vsel %vm273, %v557, -inf
    %588 = vmax.xlane.f32.xlu0 %v587
    %v589 = vpop.xlane.xlu0 %588
    %v590 = vsel %vm273, %v585, -inf
    %591 = vmax.xlane.f32.xlu0 %v590
    %v592 = vpop.xlane.xlu0 %591
    %v593 = vsub.f32 %v557, %v589
    %v594 = vsub.f32 %v585, %v592
    %v595 = vmul.f32 %v593, 1.442695
    %v596 = vpow.pop %v595
    %v597 = vmul.f32 %v594, 1.442695
    %v598 = vpow.pop %v597
    %v599 = vsel %vm273, %v596, 0.0
    %600 = vadd.xlane.f32.xlu0 %v599
    %v601 = vpop.xlane.xlu0 %600
    %v602 = vsel %vm273, %v598, 0.0
    %603 = vadd.xlane.f32.xlu0 %v602
    %v604 = vpop.xlane.xlu0 %603
    %v605 = vrcp.pop %v601
    %v606 = vrcp.pop %v604
    %v607 = vmul.f32 %v596, %v605
    %v608 = vmul.f32 %v598, %v606
    %609 = vrot.lane.b32.xlu0 %v257, 48
    %v610 = vpop.permute.xlu0 %609
    %v613 = vsel %vm273, %v607, 0
    %615 = vmatpush.msra.mxu0 0.0
    %616 = vmatpush.msra.mxu0 0.0
    %617 = vmatpush.msra.mxu0 0.0
    %618 = vmatpush.msra.mxu0 0.0
    %619 = vmatpush.msra.mxu0 0.0
    %620 = vmatpush.msra.mxu0 0.0
    %621 = vmatpush.msra.mxu0 0.0
    %622 = vmatpush.msra.mxu0 0.0
    %623 = vmatpush.msra.mxu0 0.0
    %624 = vmatpush.msra.mxu0 0.0
    %625 = vmatpush.msra.mxu0 0.0
    %626 = vmatpush.msra.mxu0 0.0
    %627 = vmatpush.msra.mxu0 0.0
    %628 = vmatpush.msra.mxu0 0.0
    %629 = vmatpush.msra.mxu0 0.0
    %630 = vmatpush.msra.mxu0 %v610
    %631 = vmatmul.f32.gmra.mxu0 %v613
    %v632 = vpop.f32.mrf.mxu0
    %v633 = vadd.f32 0.0, %v632
    %634 = vdwg.mxu0
    %635 = vrot.lane.b32.xlu0 %v260, 48
    %v636 = vpop.permute.xlu0 %635
    %v639 = vsel %vm273, %v608, 0
    %641 = vmatpush.msra.mxu0 0.0
    %642 = vmatpush.msra.mxu0 0.0
    %643 = vmatpush.msra.mxu0 0.0
    %644 = vmatpush.msra.mxu0 0.0
    %645 = vmatpush.msra.mxu0 0.0
    %646 = vmatpush.msra.mxu0 0.0
    %647 = vmatpush.msra.mxu0 0.0
    %648 = vmatpush.msra.mxu0 0.0
    %649 = vmatpush.msra.mxu0 0.0
    %650 = vmatpush.msra.mxu0 0.0
    %651 = vmatpush.msra.mxu0 0.0
    %652 = vmatpush.msra.mxu0 0.0
    %653 = vmatpush.msra.mxu0 0.0
    %654 = vmatpush.msra.mxu0 0.0
    %655 = vmatpush.msra.mxu0 0.0
    %656 = vmatpush.msra.mxu0 %v636
    %657 = vmatmul.f32.gmra.mxu0 %v639
    %v658 = vpop.f32.mrf.mxu0
    %v659 = vadd.f32 0.0, %v658
    %660 = vdwg.mxu0
    %661 = vrot.lane.b32.xlu0 %v262, 104
    %v662 = vpop.permute.xlu0 %661
    %663 = vrot.lane.b32.xlu0 %v257, 72
    %v664 = vpop.permute.xlu0 %663
    %v665 = vsel %vm273, %v662, 0
    %v667 = vsel %vm273, %v664, 0
    %669 = vmatpush.xpose.msra.mxu0 0.0
    %670 = vmatpush.xpose.msra.mxu0 0.0
    %671 = vmatpush.xpose.msra.mxu0 0.0
    %672 = vmatpush.xpose.msra.mxu0 0.0
    %673 = vmatpush.xpose.msra.mxu0 0.0
    %674 = vmatpush.xpose.msra.mxu0 0.0
    %675 = vmatpush.xpose.msra.mxu0 0.0
    %676 = vmatpush.xpose.msra.mxu0 0.0
    %677 = vmatpush.xpose.msra.mxu0 0.0
    %678 = vmatpush.xpose.msra.mxu0 0.0
    %679 = vmatpush.xpose.msra.mxu0 0.0
    %680 = vmatpush.xpose.msra.mxu0 0.0
    %681 = vmatpush.xpose.msra.mxu0 0.0
    %682 = vmatpush.xpose.msra.mxu0 0.0
    %683 = vmatpush.xpose.msra.mxu0 0.0
    %684 = vmatpush.xpose.msra.mxu0 %v667
    %685 = vmatmul.f32.gmra.mxu0 %v665
    %v686 = vpop.f32.mrf.mxu0
    %v687 = vadd.f32 %v266, %v686
    %688 = vdwg.mxu0
    %689 = vrot.lane.b32.xlu0 %v263, 104
    %v690 = vpop.permute.xlu0 %689
    %691 = vrot.lane.b32.xlu0 %v260, 72
    %v692 = vpop.permute.xlu0 %691
    %v693 = vsel %vm273, %v690, 0
    %v695 = vsel %vm273, %v692, 0
    %697 = vmatpush.xpose.msra.mxu0 0.0
    %698 = vmatpush.xpose.msra.mxu0 0.0
    %699 = vmatpush.xpose.msra.mxu0 0.0
    %700 = vmatpush.xpose.msra.mxu0 0.0
    %701 = vmatpush.xpose.msra.mxu0 0.0
    %702 = vmatpush.xpose.msra.mxu0 0.0
    %703 = vmatpush.xpose.msra.mxu0 0.0
    %704 = vmatpush.xpose.msra.mxu0 0.0
    %705 = vmatpush.xpose.msra.mxu0 0.0
    %706 = vmatpush.xpose.msra.mxu0 0.0
    %707 = vmatpush.xpose.msra.mxu0 0.0
    %708 = vmatpush.xpose.msra.mxu0 0.0
    %709 = vmatpush.xpose.msra.mxu0 0.0
    %710 = vmatpush.xpose.msra.mxu0 0.0
    %711 = vmatpush.xpose.msra.mxu0 0.0
    %712 = vmatpush.xpose.msra.mxu0 %v695
    %713 = vmatmul.f32.gmra.mxu0 %v693
    %v714 = vpop.f32.mrf.mxu0
    %v715 = vadd.f32 %v267, %v714
    %716 = vdwg.mxu0
    %v717 = vsel %vm273, %v687, -inf
    %718 = vmax.xlane.f32.xlu0 %v717
    %v719 = vpop.xlane.xlu0 %718
    %v720 = vsel %vm273, %v715, -inf
    %721 = vmax.xlane.f32.xlu0 %v720
    %v722 = vpop.xlane.xlu0 %721
    %v723 = vsub.f32 %v687, %v719
    %v724 = vsub.f32 %v715, %v722
    %v725 = vmul.f32 %v723, 1.442695
    %v726 = vpow.pop %v725
    %v727 = vmul.f32 %v724, 1.442695
    %v728 = vpow.pop %v727
    %v729 = vsel %vm273, %v726, 0.0
    %730 = vadd.xlane.f32.xlu0 %v729
    %v731 = vpop.xlane.xlu0 %730
    %v732 = vsel %vm273, %v728, 0.0
    %733 = vadd.xlane.f32.xlu0 %v732
    %v734 = vpop.xlane.xlu0 %733
    %v735 = vrcp.pop %v731
    %v736 = vrcp.pop %v734
    %v737 = vmul.f32 %v726, %v735
    %v738 = vmul.f32 %v728, %v736
    %739 = vrot.lane.b32.xlu0 %v257, 40
    %v740 = vpop.permute.xlu0 %739
    %v743 = vsel %vm273, %v737, 0
    %745 = vmatpush.msra.mxu0 0.0
    %746 = vmatpush.msra.mxu0 0.0
    %747 = vmatpush.msra.mxu0 0.0
    %748 = vmatpush.msra.mxu0 0.0
    %749 = vmatpush.msra.mxu0 0.0
    %750 = vmatpush.msra.mxu0 0.0
    %751 = vmatpush.msra.mxu0 0.0
    %752 = vmatpush.msra.mxu0 0.0
    %753 = vmatpush.msra.mxu0 0.0
    %754 = vmatpush.msra.mxu0 0.0
    %755 = vmatpush.msra.mxu0 0.0
    %756 = vmatpush.msra.mxu0 0.0
    %757 = vmatpush.msra.mxu0 0.0
    %758 = vmatpush.msra.mxu0 0.0
    %759 = vmatpush.msra.mxu0 0.0
    %760 = vmatpush.msra.mxu0 %v740
    %761 = vmatmul.f32.gmra.mxu0 %v743
    %v762 = vpop.f32.mrf.mxu0
    %v763 = vadd.f32 0.0, %v762
    %764 = vdwg.mxu0
    %765 = vrot.lane.b32.xlu0 %v260, 40
    %v766 = vpop.permute.xlu0 %765
    %v769 = vsel %vm273, %v738, 0
    %771 = vmatpush.msra.mxu0 0.0
    %772 = vmatpush.msra.mxu0 0.0
    %773 = vmatpush.msra.mxu0 0.0
    %774 = vmatpush.msra.mxu0 0.0
    %775 = vmatpush.msra.mxu0 0.0
    %776 = vmatpush.msra.mxu0 0.0
    %777 = vmatpush.msra.mxu0 0.0
    %778 = vmatpush.msra.mxu0 0.0
    %779 = vmatpush.msra.mxu0 0.0
    %780 = vmatpush.msra.mxu0 0.0
    %781 = vmatpush.msra.mxu0 0.0
    %782 = vmatpush.msra.mxu0 0.0
    %783 = vmatpush.msra.mxu0 0.0
    %784 = vmatpush.msra.mxu0 0.0
    %785 = vmatpush.msra.mxu0 0.0
    %786 = vmatpush.msra.mxu0 %v766
    %787 = vmatmul.f32.gmra.mxu0 %v769
    %v788 = vpop.f32.mrf.mxu0
    %v789 = vadd.f32 0.0, %v788
    %790 = vdwg.mxu0
    %793 = vrot.lane.b32.xlu0 %v503, 8
    %v794 = vpop.permute.xlu0 %793
    %795 = vrot.lane.b32.xlu0 %v529, 8
    %v796 = vpop.permute.xlu0 %795
    %801 = vrot.lane.b32.xlu0 %v633, 16
    %v802 = vpop.permute.xlu0 %801
    %803 = vrot.lane.b32.xlu0 %v659, 16
    %v804 = vpop.permute.xlu0 %803
    %809 = vrot.lane.b32.xlu0 %v763, 24
    %v810 = vpop.permute.xlu0 %809
    %811 = vrot.lane.b32.xlu0 %v789, 24
    %v812 = vpop.permute.xlu0 %811
    %v815 = vsel %vm273, %v373, %v794
    %v816 = vsel %vm273, %v399, %v796
    %vm817 = vcmask 130048
    %v818 = vsel %vm817, %v815, %v802
    %v819 = vsel %vm817, %v816, %v804
    %vm820 = vcmask 195584
    %v821 = vsel %vm820, %v818, %v810
    %v822 = vsel %vm820, %v819, %v812
    %v823 = vld [vmem:[%s6] sm:$0xff]
    %v824 = vld [vmem:[%s6 + $0x8] sm:$0xff]
    %v825 = vld [vmem:[%s6 + $0x10] sm:$0xff]
    %v826 = vld [vmem:[%s6 + $0x18] sm:$0xff]
    %v827 = vld [vmem:[#allocation8] sm:$0x1]
    %v829 = vperm.slane %v827, 0
    %v832 = vsel %vm163, %v821, 0
    %v835 = vsel %vm163, %v822, 0
    %837 = vmatpush.msra.mxu0 0.0
    %838 = vmatpush.msra.mxu0 0.0
    %839 = vmatpush.msra.mxu0 0.0
    %840 = vmatpush.msra.mxu0 0.0
    %841 = vmatpush.msra.mxu0 0.0
    %842 = vmatpush.msra.mxu0 0.0
    %843 = vmatpush.msra.mxu0 0.0
    %844 = vmatpush.msra.mxu0 0.0
    %845 = vmatpush.msra.mxu0 0.0
    %846 = vmatpush.msra.mxu0 0.0
    %847 = vmatpush.msra.mxu0 0.0
    %848 = vmatpush.msra.mxu0 0.0
    %849 = vmatpush.msra.mxu0 %v826
    %850 = vmatpush.msra.mxu0 %v825
    %851 = vmatpush.msra.mxu0 %v824
    %852 = vmatpush.msra.mxu0 %v823
    %853 = vmatmul.f32.gmra.mxu0 %v832
    %v854 = vpop.f32.mrf.mxu0
    %v855 = vadd.f32 %v829, %v854
    %856 = vmatmul.f32.gmra.mxu0 %v835
    %v857 = vpop.f32.mrf.mxu0
    %v858 = vadd.f32 %v829, %v857
    %859 = vdwg.mxu0
    %v860 = vadd.f32 %v157, %v855
    %v861 = vadd.f32 %v158, %v858
    %v862 = vld [vmem:[#allocation10] sm:$0x1]
    %v863 = vld [vmem:[#allocation11] sm:$0x1]
    %v864 = vsel %vm163, %v860, 0.0
    %865 = vadd.xlane.f32.xlu0 %v864
    %v866 = vpop.xlane.xlu0 %865
    %v867 = vsel %vm163, %v861, 0.0
    %868 = vadd.xlane.f32.xlu0 %v867
    %v869 = vpop.xlane.xlu0 %868
    %v870 = vmul.f32 %v866, %v176
    %v871 = vmul.f32 %v869, %v176
    %v872 = vsub.f32 %v860, %v870
    %v873 = vsub.f32 %v861, %v871
    %v874 = vmul.f32 %v872, %v872
    %v875 = vmul.f32 %v873, %v873
    %v876 = vsel %vm163, %v874, 0.0
    %877 = vadd.xlane.f32.xlu0 %v876
    %v878 = vpop.xlane.xlu0 %877
    %v879 = vsel %vm163, %v875, 0.0
    %880 = vadd.xlane.f32.xlu0 %v879
    %v881 = vpop.xlane.xlu0 %880
    %v882 = vmul.f32 %v878, %v176
    %v883 = vmul.f32 %v881, %v176
    %v884 = vadd.f32 %v882, 1e-05
    %v885 = vadd.f32 %v883, 1e-05
    %v886 = vrsqrt.pop %v884
    %v887 = vmul.f32 %v886, %v884
    %v888 = vmul.f32 %v887, %v886
    %v889 = vmul.f32 0.5, %v888
    %v890 = vsub.f32 1.5, %v889
    %v891 = vmul.f32 %v886, %v890
    %vm892 = vweird.f32 %v884
    %vm893 = vweird.f32 %v886
    %vm894 = vmor %vm892, %vm893
    %v895 = vsel %vm894, %v886, %v891
    %v896 = vrsqrt.pop %v885
    %v897 = vmul.f32 %v896, %v885
    %v898 = vmul.f32 %v897, %v896
    %v899 = vmul.f32 0.5, %v898
    %v900 = vsub.f32 1.5, %v899
    %v901 = vmul.f32 %v896, %v900
    %vm902 = vweird.f32 %v885
    %vm903 = vweird.f32 %v896
    %vm904 = vmor %vm902, %vm903
    %v905 = vsel %vm904, %v896, %v901
    %v906 = vmul.f32 %v872, %v895
    %v907 = vmul.f32 %v873, %v905
    %v909 = vperm.slane %v862, 0
    %v911 = vmul.f32 %v906, %v909
    %v912 = vmul.f32 %v907, %v909
    %v914 = vperm.slane %v863, 0
    %v916 = vadd.f32 %v911, %v914
    %v917 = vadd.f32 %v912, %v914
    %v918 = vld [vmem:[%s10] sm:$0xff]
    %v919 = vld [vmem:[%s10 + $0x8] sm:$0xff]
    %v920 = vld [vmem:[%s10 + $0x10] sm:$0xff]
    %v921 = vld [vmem:[%s10 + $0x18] sm:$0xff]
    %v922 = vld [vmem:[#allocation13] sm:$0x1]
    %v924 = vperm.slane %v922, 0
    %v927 = vsel %vm163, %v916, 0
    %v930 = vsel %vm163, %v917, 0
    %932 = vmatpush.msra.mxu0 0.0
    %933 = vmatpush.msra.mxu0 0.0
    %934 = vmatpush.msra.mxu0 0.0
    %935 = vmatpush.msra.mxu0 0.0
    %936 = vmatpush.msra.mxu0 0.0
    %937 = vmatpush.msra.mxu0 0.0
    %938 = vmatpush.msra.mxu0 0.0
    %939 = vmatpush.msra.mxu0 0.0
    %940 = vmatpush.msra.mxu0 0.0
    %941 = vmatpush.msra.mxu0 0.0
    %942 = vmatpush.msra.mxu0 0.0
    %943 = vmatpush.msra.mxu0 0.0
    %944 = vmatpush.msra.mxu0 %v921
    %945 = vmatpush.msra.mxu0 %v920
    %946 = vmatpush.msra.mxu0 %v919
    %947 = vmatpush.msra.mxu0 %v918
    %948 = vmatmul.f32.gmra.mxu0 %v927
    %v949 = vpop.f32.mrf.mxu0
    %v950 = vadd.f32 %v924, %v949
    %951 = vmatmul.f32.gmra.mxu0 %v930
    %v952 = vpop.f32.mrf.mxu0
    %v953 = vadd.f32 %v924, %v952
    %954 = vdwg.mxu0
    %v955 = vmax.f32 %v950, 0.0
    %v956 = vmax.f32 %v953, 0.0
    %v957 = vld [vmem:[%s12] sm:$0xff]
    %v958 = vld [vmem:[%s12 + $0x8] sm:$0xff]
    %v959 = vld [vmem:[%s12 + $0x10] sm:$0xff]
    %v960 = vld [vmem:[%s12 + $0x18] sm:$0xff]
    %v961 = vld [vmem:[%s12 + $0x20] sm:$0xff]
    %v962 = vld [vmem:[%s12 + $0x28] sm:$0xff]
    %v963 = vld [vmem:[%s12 + $0x30] sm:$0xff]
    %v964 = vld [vmem:[%s12 + $0x38] sm:$0xff]
    %v965 = vld [vmem:[#allocation14] sm:$0x1]
    %v967 = vperm.slane %v965, 0
    %vm969 = vcmask 523264
    %v971 = vsel %vm969, %v955, 0
    %v974 = vsel %vm969, %v956, 0
    %976 = vmatpush.msra.mxu0 0.0
    %977 = vmatpush.msra.mxu0 0.0
    %978 = vmatpush.msra.mxu0 0.0
    %979 = vmatpush.msra.mxu0 0.0
    %980 = vmatpush.msra.mxu0 0.0
    %981 = vmatpush.msra.mxu0 0.0
    %982 = vmatpush.msra.mxu0 0.0
    %983 = vmatpush.msra.mxu0 0.0
    %984 = vmatpush.msra.mxu0 %v964
    %985 = vmatpush.msra.mxu0 %v963
    %986 = vmatpush.msra.mxu0 %v962
    %987 = vmatpush.msra.mxu0 %v961
    %988 = vmatpush.msra.mxu0 %v960
    %989 = vmatpush.msra.mxu0 %v959
    %990 = vmatpush.msra.mxu0 %v958
    %991 = vmatpush.msra.mxu0 %v957
    %992 = vmatmul.f32.gmra.mxu0 %v971
    %v993 = vpop.f32.mrf.mxu0
    %v994 = vadd.f32 %v967, %v993
    %995 = vmatmul.f32.gmra.mxu0 %v974
    %v996 = vpop.f32.mrf.mxu0
    %v997 = vadd.f32 %v967, %v996
    %998 = vdwg.mxu0
    %v999 = vadd.f32 %v860, %v994
    %v1000 = vadd.f32 %v861, %v997
    %1001 = vst.msk [vmem:[#allocation16] sm:$0xff] %vm163, %v999
    %1002 = vst.msk [vmem:[#allocation16 + $0x8] sm:$0xff] %vm163, %v1000
    // Predicated region
    $region90: #{extraction_preln_transformer.3} parent=1 // pred_check
      _
    $region91: #{extraction_preln_transformer.3} parent=1 // pred_check_branch
      %1004 = sbr.rel (0) target = $region93
    $region92: #{extraction_preln_transformer.3} parent=1 // pred_region
      %1006 = vsyncadd [#allocation4], 0
      %s1007 = sshll.u32 [#allocation16], 4
      %s1008 = int_to_ptr.vmem [resolvable:$true] %s1007
      %s1009 = sshll.u32 %s14, 4
      %s1010 = int_to_ptr.hbm [resolvable:$true] %s1009
      %1015 = dma.vmem_to_hbm [thread:$0]  %s1008, 256, %s1010, [#allocation4], 128, 128, 8
    $region93: #{extraction_preln_transformer.3} parent=1 // pred_fallthru
      _
    // Predicated region
    $region94: #{extraction_preln_transformer.3} parent=1 // pred_check
      _
    $region95: #{extraction_preln_transformer.3} parent=1 // pred_check_branch
      %1017 = sbr.rel (0) target = $region97
    $region96: #{extraction_preln_transformer.3} parent=1 // pred_region
      %1019 = dma.done [#allocation4], 256
    $region97: #{extraction_preln_transformer.3} parent=1 // pred_fallthru
      _
    %1020 = vsyncpa [#allocation3], 1
    %1021 = vsyncpa [#allocation6], 1
    %1022 = vsyncpa [#allocation9], 1
    %1023 = vsyncpa [#allocation12], 1
    %1024 = vsyncpa [#allocation15], 1
    %1025 = vsyncpa [#allocation4], 1

</llo_original>
